<compile_context>
chip_gen: v6e
topology: v6e:2x2x1
jax: 0.10.0
libtpu: 0.0.40
codegen_flags: <defaults>
</compile_context>

<pallas_src>
import jax
import jax.numpy as jnp
from jax.experimental import pallas as pl
from jax.experimental.pallas import tpu as pltpu

_PREC = jax.lax.Precision.HIGHEST   # explicit: keep f32 semantics end-to-end


# ----------------------------------------------------------------------------
# Kernel: 3 MXU dots per batch tile, everything else is VPU elementwise.
# ----------------------------------------------------------------------------
def make_dynamics_kernel(two_h, rep_offset):
    def kernel(sa_ref, w1_ref, b1_ref, w2_ref, b2_ref, sel_ref, out_ref):
        sa = sa_ref[...]                                         # (TN, S+A)

        # Fused layer-1 (+ replication / pass-through columns):
        #   z = [pre_h_A | pre_h_B | pad | s-rep | a-rep | s-pass]
        z = jnp.dot(sa, w1_ref[...], precision=_PREC,
                    preferred_element_type=jnp.float32)          # (TN, W)

        h = jnp.maximum(z[:, :two_h] + b1_ref[...], 0.0)         # (TN, 2H)
        rep = z[:, rep_offset:]                                  # (TN, R)

        # Fused block-diagonal layer-2: ab = [A_flat | B_flat | ones]
        ab = jnp.dot(h, w2_ref[...], precision=_PREC,
                     preferred_element_type=jnp.float32) + b2_ref[...]

        # One selector matmul emits  state + (A@s + B@a) * dt  directly
        # (dt and the pass-through identity are folded into sel).
        out_ref[...] = jnp.dot(ab * rep, sel_ref[...], precision=_PREC,
                               preferred_element_type=jnp.float32)   # (TN, S)

    return kernel


# ----------------------------------------------------------------------------
# Generation-aware column packing of the fused layer-1 output.
# ----------------------------------------------------------------------------
def _default_rep_offset(two_h):
    # v6e/v7x MXU output groups are 256 lanes wide: padding the rep block to
    # start at a 128-lane boundary is free on the MXU and makes the rep slice
    # tile-aligned (no lane-rotate before `ab * rep`).  On v5e / older chips
    # the output group is 128 wide, so padding would cost an extra MXU pass
    # on the binding unit -> keep the compact layout there.
    try:
        kind = jax.devices()[0].device_kind.lower()
    except Exception:
        kind = ""
    if ("v6" in kind) or ("v7" in kind):
        return pl.cdiv(two_h, 128) * 128
    return two_h


# ----------------------------------------------------------------------------
# One-time parameter packing (fusion constants; built once, NOT per call).
# ----------------------------------------------------------------------------
def pack_params(params, state_size, action_size, hidden_size, dt,
                rep_offset=None):
    S, A, H = state_size, action_size, hidden_size
    SS, SA = S * S, S * A
    R = SS + SA + S                      # [A_flat | B_flat | state pass-through]
    two_h = 2 * H
    if rep_offset is None:
        rep_offset = _default_rep_offset(two_h)
    rep_offset = max(int(rep_offset), two_h)
    W = rep_offset + R

    # --- fused layer-1 weight + replication / pass-through columns ----------
    W1 = jnp.zeros((S + A, W), jnp.float32)
    W1 = W1.at[:, :H].set(params["A1_w"])
    W1 = W1.at[:, H:two_h].set(params["B1_w"])
    # state replication: rep[n, i*S + j] = state[n, j]
    W1 = W1.at[jnp.arange(SS) % S, rep_offset + jnp.arange(SS)].set(1.0)
    # action replication: rep[n, SS + i*A + k] = action[n, k]
    W1 = W1.at[S + jnp.arange(SA) % A, rep_offset + SS + jnp.arange(SA)].set(1.0)
    # state pass-through (fuses the "+ state" epilogue into the last matmul)
    W1 = W1.at[jnp.arange(S), rep_offset + SS + SA + jnp.arange(S)].set(1.0)

    b1 = jnp.concatenate([params["A1_b"], params["B1_b"]], axis=1)      # (1, 2H)

    # --- fused block-diagonal layer-2 ---------------------------------------
    W2 = jnp.zeros((two_h, R), jnp.float32)
    W2 = W2.at[:H, :SS].set(params["A2_w"])
    W2 = W2.at[H:, SS:SS + SA].set(params["B2_w"])
    b2 = jnp.concatenate([params["A2_b"], params["B2_b"],
                          jnp.ones((1, S), jnp.float32)], axis=1)       # (1, R)

    # --- group-sum selector: dt folded in, plus pass-through identity -------
    sel = jnp.zeros((R, S), jnp.float32)
    sel = sel.at[jnp.arange(SS), jnp.arange(SS) // S].set(dt)
    sel = sel.at[SS + jnp.arange(SA), jnp.arange(SA) // A].set(dt)
    sel = sel.at[SS + SA + jnp.arange(S), jnp.arange(S)].set(1.0)

    return dict(W1=W1, b1=b1, W2=W2, b2=b2, sel=sel,
                rep_offset=rep_offset, two_h=two_h)


# ----------------------------------------------------------------------------
# Tile sizing: big tiles (amortize ~0.35 us/step), but keep >= 4 grid steps
# so the "parallel" batch axis can shard across both TCs on v7x and pipeline.
# ----------------------------------------------------------------------------
def _choose_tile_n(N):
    if N <= 8:
        return N
    tn = min(4096, max(8, pl.cdiv(N, 4)))
    tn = min(tn, N)
    if tn < N:
        tn = max(8, (tn // 8) * 8)       # sublane-divisible blocks
    return tn


# ----------------------------------------------------------------------------
# Wrapper: batch-gridded pallas_call, resident packed weights.
# ----------------------------------------------------------------------------
def dynamics_forward(packed, state_batch, action_batch, *, tile_n=None):
    """state_batch: (N, S) f32, action_batch: (N, A) f32 -> (N, S) f32."""
    N, S = state_batch.shape
    A = action_batch.shape[1]

    # Pack the kernel input once so layer-1 is a single K=(S+A) dot.
    sa = jnp.concatenate([state_batch.astype(jnp.float32),
                          action_batch.astype(jnp.float32)], axis=-1)   # (N, S+A)

    if tile_n is None:
        tile_n = _choose_tile_n(N)
    tile_n = min(int(tile_n), N)
    if tile_n < N:
        tile_n = max(8, (tile_n // 8) * 8)
    grid = (pl.cdiv(N, tile_n),)

    def resident(arr):   # weights: same block every grid step -> single DMA
        return pl.BlockSpec(arr.shape, lambda i: (0, 0))

    in_specs = [
        pl.BlockSpec((tile_n, S + A), lambda i: (i, 0)),   # packed [state|action]
        resident(packed["W1"]),
        resident(packed["b1"]),
        resident(packed["W2"]),
        resident(packed["b2"]),
        resident(packed["sel"]),
    ]
    out_specs = pl.BlockSpec((tile_n, S), lambda i: (i, 0))

    # Real VMEM cost is several KiB/row (narrow slabs pad the lane dim to 128
    # and the z/h/ab temporaries add more); raise the scoped limit explicitly
    # but stay well under v7x's 64 MiB physical VMEM.
    vmem_limit = int(min(48 * 2**20, max(16 * 2**20, tile_n * 8192)))

    return pl.pallas_call(
        make_dynamics_kernel(packed["two_h"], packed["rep_offset"]),
        out_shape=jax.ShapeDtypeStruct((N, S), jnp.float32),
        grid=grid,
        in_specs=in_specs,
        out_specs=out_specs,
        compiler_params=pltpu.CompilerParams(
            dimension_semantics=("parallel",),      # both TCs on v7x
            vmem_limit_bytes=vmem_limit),
    )(sa, packed["W1"], packed["b1"], packed["W2"], packed["b2"], packed["sel"])


# ----------------------------------------------------------------------------
# Init (PyTorch nn.Linear-style; weights stored (in_features, out_features))
# ----------------------------------------------------------------------------
def init_params(key, state_size, action_size, hidden_size):
    S, A, H = state_size, action_size, hidden_size
    in_dim = S + A

    def linear(k, fan_in, fan_out):
        kw, kb = jax.random.split(k)
        bound = 1.0 / jnp.sqrt(fan_in)
        w = jax.random.uniform(kw, (fan_in, fan_out), jnp.float32, -bound, bound)
        b = jax.random.uniform(kb, (1, fan_out), jnp.float32, -bound, bound)
        return w, b

    k1, k2, k3, k4 = jax.random.split(key, 4)
    A1_w, A1_b = linear(k1, in_dim, H)
    A2_w, A2_b = linear(k2, H, S * S)
    B1_w, B1_b = linear(k3, in_dim, H)
    B2_w, B2_b = linear(k4, H, S * A)
    return dict(A1_w=A1_w, A1_b=A1_b, A2_w=A2_w, A2_b=A2_b,
                B1_w=B1_w, B1_b=B1_b, B2_w=B2_w, B2_b=B2_b)


# ----------------------------------------------------------------------------
# Pure-JAX reference mirroring the PyTorch forward (batched path), f32 math.
# ----------------------------------------------------------------------------
def dynamics_forward_ref(params, state_batch, action_batch, *, dt):
    N, S = state_batch.shape
    sa = jnp.concatenate([state_batch, action_batch], axis=-1)
    h_a = jax.nn.relu(jnp.dot(sa, params["A1_w"], precision=_PREC) + params["A1_b"])
    A_mat = (jnp.dot(h_a, params["A2_w"], precision=_PREC)
             + params["A2_b"]).reshape(N, S, S)
    h_b = jax.nn.relu(jnp.dot(sa, params["B1_w"], precision=_PREC) + params["B1_b"])
    B_mat = (jnp.dot(h_b, params["B2_w"], precision=_PREC)
             + params["B2_b"]).reshape(N, S, action_batch.shape[1])
    ds = (jnp.einsum("nij,nj->ni", A_mat, state_batch, precision=_PREC) +
          jnp.einsum("nij,nj->ni", B_mat, action_batch, precision=_PREC))
    return state_batch + ds * dt


if __name__ == "__main__":
    STATE_SIZE = 4
    ACTION_SIZE = 2
    HIDDEN_SIZE = 32
    DT = 0.1
    N = 256          # small demo batch; grid of 4 tiles exercises pipelining

    root = jax.random.PRNGKey(0)
    kp, ks, ka = jax.random.split(root, 3)

    params = init_params(kp, STATE_SIZE, ACTION_SIZE, HIDDEN_SIZE)
    packed = pack_params(params, STATE_SIZE, ACTION_SIZE, HIDDEN_SIZE, DT)

    state_batch = jax.random.normal(ks, (N, STATE_SIZE), jnp.float32)
    action_batch = jax.random.normal(ka, (N, ACTION_SIZE), jnp.float32)

    out = dynamics_forward(packed, state_batch, action_batch)
    out = jax.block_until_ready(out)

    ref = dynamics_forward_ref(params, state_batch, action_batch, dt=DT)
    assert out.shape == (N, STATE_SIZE)
    assert jnp.allclose(out, ref, atol=1e-5, rtol=1e-5), "mismatch vs reference"

    # TODO(synk): the PyTorch resize_input() single-sample (1-D state) path is
    # not replicated; callers should pass 2-D (N,S)/(N,A) batches.
    print("KERNEL_OK")
</pallas_src>

<mosaic_0001>
module attributes {stable_mosaic.version = 11 : i64} {
  func.func @kernel(%arg0: i32, %arg1: memref<64x6xf32, #tpu.memory_space<vmem>>, %arg2: memref<6x92xf32, #tpu.memory_space<vmem>>, %arg3: memref<1x64xf32, #tpu.memory_space<vmem>>, %arg4: memref<64x28xf32, #tpu.memory_space<vmem>>, %arg5: memref<1x28xf32, #tpu.memory_space<vmem>>, %arg6: memref<28x4xf32, #tpu.memory_space<vmem>>, %arg7: memref<64x4xf32, #tpu.memory_space<vmem>>) attributes {dimension_semantics = [#tpu.dimension_semantics<parallel>], iteration_bounds = array<i64: 4>, scalar_prefetch = 0 : i64, scratch_operands = 0 : i64, tpu.core_type = #tpu.core_type<tc>, window_params = [{transform_indices = @transform_0, window_bounds = array<i64: 64, 6>}, {pipeline_mode = #tpu.pipeline_mode<synchronous>, transform_indices = @transform_1, window_bounds = array<i64: 6, 92>}, {pipeline_mode = #tpu.pipeline_mode<synchronous>, transform_indices = @transform_2, window_bounds = array<i64: 1, 64>}, {pipeline_mode = #tpu.pipeline_mode<synchronous>, transform_indices = @transform_3, window_bounds = array<i64: 64, 28>}, {pipeline_mode = #tpu.pipeline_mode<synchronous>, transform_indices = @transform_4, window_bounds = array<i64: 1, 28>}, {pipeline_mode = #tpu.pipeline_mode<synchronous>, transform_indices = @transform_5, window_bounds = array<i64: 28, 4>}, {transform_indices = @transform_6, window_bounds = array<i64: 64, 4>}]} {
    %c0 = arith.constant 0 : index
    %c0_0 = arith.constant 0 : index
    %0 = vector.load %arg1[%c0, %c0_0] : memref<64x6xf32, #tpu.memory_space<vmem>>, vector<64x6xf32>
    %c0_1 = arith.constant 0 : index
    %c0_2 = arith.constant 0 : index
    %1 = vector.load %arg2[%c0_1, %c0_2] : memref<6x92xf32, #tpu.memory_space<vmem>>, vector<6x92xf32>
    %cst = arith.constant dense<0.000000e+00> : vector<64x92xf32>
    %2 = tpu.matmul %0, %1, %cst {dimension_numbers = #tpu.dot_dimension_numbers<[1], [0], [0], [1], [0, 0, 1, 1], [], []>, precision = #tpu.contract_precision<fp32>} : vector<64x6xf32>, vector<6x92xf32>, vector<64x92xf32> -> vector<64x92xf32>
    %3 = vector.extract_strided_slice %2 {offsets = [0, 0], sizes = [64, 64], strides = [1, 1]} : vector<64x92xf32> to vector<64x64xf32>
    %c0_3 = arith.constant 0 : index
    %c0_4 = arith.constant 0 : index
    %4 = vector.load %arg3[%c0_3, %c0_4] : memref<1x64xf32, #tpu.memory_space<vmem>>, vector<1x64xf32>
    %5 = vector.broadcast %4 : vector<1x64xf32> to vector<64x64xf32>
    %6 = arith.addf %3, %5 : vector<64x64xf32>
    %cst_5 = arith.constant 0.000000e+00 : f32
    %7 = vector.broadcast %cst_5 : f32 to vector<64x64xf32>
    %8 = arith.maximumf %6, %7 : vector<64x64xf32>
    %9 = vector.extract_strided_slice %2 {offsets = [0, 64], sizes = [64, 28], strides = [1, 1]} : vector<64x92xf32> to vector<64x28xf32>
    %c0_6 = arith.constant 0 : index
    %c0_7 = arith.constant 0 : index
    %10 = vector.load %arg4[%c0_6, %c0_7] : memref<64x28xf32, #tpu.memory_space<vmem>>, vector<64x28xf32>
    %cst_8 = arith.constant dense<0.000000e+00> : vector<64x28xf32>
    %11 = tpu.matmul %8, %10, %cst_8 {dimension_numbers = #tpu.dot_dimension_numbers<[1], [0], [0], [1], [0, 0, 1, 1], [], []>, precision = #tpu.contract_precision<fp32>} : vector<64x64xf32>, vector<64x28xf32>, vector<64x28xf32> -> vector<64x28xf32>
    %c0_9 = arith.constant 0 : index
    %c0_10 = arith.constant 0 : index
    %12 = vector.load %arg5[%c0_9, %c0_10] : memref<1x28xf32, #tpu.memory_space<vmem>>, vector<1x28xf32>
    %13 = vector.broadcast %12 : vector<1x28xf32> to vector<64x28xf32>
    %14 = arith.addf %11, %13 : vector<64x28xf32>
    %15 = arith.mulf %14, %9 : vector<64x28xf32>
    %c0_11 = arith.constant 0 : index
    %c0_12 = arith.constant 0 : index
    %16 = vector.load %arg6[%c0_11, %c0_12] : memref<28x4xf32, #tpu.memory_space<vmem>>, vector<28x4xf32>
    %cst_13 = arith.constant dense<0.000000e+00> : vector<64x4xf32>
    %17 = tpu.matmul %15, %16, %cst_13 {dimension_numbers = #tpu.dot_dimension_numbers<[1], [0], [0], [1], [0, 0, 1, 1], [], []>, precision = #tpu.contract_precision<fp32>} : vector<64x28xf32>, vector<28x4xf32>, vector<64x4xf32> -> vector<64x4xf32>
    %c0_14 = arith.constant 0 : index
    %c0_15 = arith.constant 0 : index
    %18 = vector.load %arg7[%c0_14, %c0_15] : memref<64x4xf32, #tpu.memory_space<vmem>>, vector<64x4xf32>
    tpu.vector_store %arg7[%c0_14, %c0_15], %17 {strides = array<i32>} : memref<64x4xf32, #tpu.memory_space<vmem>>, vector<64x4xf32>,
    return
  }
  func.func @transform_0(%arg0: i32) -> (i32, i32) {
    %c0_i32 = arith.constant 0 : i32
    %c0_i32_0 = arith.constant 0 : i32
    return %arg0, %c0_i32 : i32, i32
  }
  func.func @transform_1(%arg0: i32) -> (i32, i32) {
    %c0_i32 = arith.constant 0 : i32
    %c0_i32_0 = arith.constant 0 : i32
    %c0_i32_1 = arith.constant 0 : i32
    return %c0_i32, %c0_i32_0 : i32, i32
  }
  func.func @transform_2(%arg0: i32) -> (i32, i32) {
    %c0_i32 = arith.constant 0 : i32
    %c0_i32_0 = arith.constant 0 : i32
    %c0_i32_1 = arith.constant 0 : i32
    return %c0_i32, %c0_i32_0 : i32, i32
  }
  func.func @transform_3(%arg0: i32) -> (i32, i32) {
    %c0_i32 = arith.constant 0 : i32
    %c0_i32_0 = arith.constant 0 : i32
    %c0_i32_1 = arith.constant 0 : i32
    return %c0_i32, %c0_i32_0 : i32, i32
  }
  func.func @transform_4(%arg0: i32) -> (i32, i32) {
    %c0_i32 = arith.constant 0 : i32
    %c0_i32_0 = arith.constant 0 : i32
    %c0_i32_1 = arith.constant 0 : i32
    return %c0_i32, %c0_i32_0 : i32, i32
  }
  func.func @transform_5(%arg0: i32) -> (i32, i32) {
    %c0_i32 = arith.constant 0 : i32
    %c0_i32_0 = arith.constant 0 : i32
    %c0_i32_1 = arith.constant 0 : i32
    return %c0_i32, %c0_i32_0 : i32, i32
  }
  func.func @transform_6(%arg0: i32) -> (i32, i32) {
    %c0_i32 = arith.constant 0 : i32
    %c0_i32_0 = arith.constant 0 : i32
    return %arg0, %c0_i32 : i32, i32
  }
}

</mosaic_0001>

<llo_original>
// kernel: tpu_custom_call.1
$region0: #{tpu_custom_call.1}
  #allocation0 [shape = 'u32[]', space=smem, size = 0x4, offset = 0x4, fixed_abs, tag = 'smem constant byte address 0x4 - core index']
  #allocation1 [shape = 'u32[144,128]{1,0:T(1,128)}', space=vmem, size = 0x12000, scoped, tag = 'internal scratch']
  %s0 = inlined_call_operand.vmem [shape: f32[256,6], index: 0, kind: input, shape index: {}]
  %s1 = inlined_call_operand.vmem [shape: f32[6,92], index: 1, kind: input, shape index: {}]
  %s2 = inlined_call_operand.vmem [shape: f32[1,64], index: 2, kind: input, shape index: {}]
  %s3 = inlined_call_operand.vmem [shape: f32[64,28], index: 3, kind: input, shape index: {}]
  %s4 = inlined_call_operand.vmem [shape: f32[1,28], index: 4, kind: input, shape index: {}]
  %s5 = inlined_call_operand.vmem [shape: f32[28,4], index: 5, kind: input, shape index: {}]
  %s6 = inlined_call_operand.vmem [shape: f32[256,4], index: 6, kind: output, shape index: {}]
  %s7 = sld [smem:[#allocation0]]
  $region57: #{tpu_custom_call.1} parent=0
    _
  %s9 = ssub.s32 1, %s7
  %s10 = scalar_select 0, %s9, %s7
  loop: start=0, step=1, limit=6
  $region2: #{tpu_custom_call.1} parent=0 // loop_pre_header
    _
  $region3: #{tpu_custom_call.1} parent=0 // loop_header
    %s12 = sphi 0, %s16
    %p13 = scmp.ge.s32.totalorder %s12, 6
    %s22 = sphi 0, %s24
    %s25 = sphi 0, %s22
    %s26 = sphi 0, %s25
    %s42 = sphi 0, %s26
    %s46 = sphi 0, %s46
    %s48 = sphi 0, %s46
    %s49 = sphi 0, %s48
    %s63 = sphi 0, %s49
    %s67 = sphi 0, %s67
    %s69 = sphi 0, %s67
    %s70 = sphi 0, %s69
    %s84 = sphi 0, %s70
    %s88 = sphi 0, %s88
    %s90 = sphi 0, %s88
    %s91 = sphi 0, %s90
    %s105 = sphi 0, %s91
    %s109 = sphi 0, %s109
    %s111 = sphi 0, %s109
    %s112 = sphi 0, %s111
    %s126 = sphi 0, %s112
    %s130 = sphi 0, %s130
    %s132 = sphi 0, %s130
    %s133 = sphi 0, %s132
    %s147 = sphi 0, %s133
    %s153 = sphi 0, %s155
    %s156 = sphi 0, %s153
    %s157 = sphi 0, %s156
    %s173 = sphi 0, %s157
  $region4: #{tpu_custom_call.1} parent=0 // loop_header_branch
    %15 = sbr.rel (%p13) target = $region8
  $region5: #{tpu_custom_call.1} parent=0 // loop_body
    %s17 = ssub.s32 %s12, 1
    %s18 = ssub.s32 %s12, 2
    %s19 = sadd.s32 %s12, 1
    %s20 = ssub.s32 %s12, %s19
    %p21 = scmp.eq.s32.totalorder %s20, 0
    %s23 = sadd.s32 %s22, 1
    %s24 = scalar_select %p21, %s22, %s23
    %p27 = pneg %p21
    %p28 = scmp.eq.s32.totalorder %s12, 3
    %p29 = por %p27, %p28
    %p30 = scmp.ne.s32.totalorder %s22, %s25
    %p31 = scmp.eq.s32.totalorder %s12, 0
    %p32 = por %p30, %p31
    %p33 = scmp.ne.s32.totalorder %s22, %s25
    %p34 = scmp.eq.s32.totalorder %s17, 3
    %p35 = por %p33, %p34
    %p36 = scmp.ne.s32.totalorder %s25, %s26
    %p37 = scmp.eq.s32.totalorder %s17, 0
    %p38 = por %p36, %p37
    %p39 = scmp.ne.s32.totalorder %s25, %s26
    %p40 = scmp.eq.s32.totalorder %s18, 3
    %p41 = por %p39, %p40
    %p43 = scmp.ne.s32.totalorder %s26, %s42
    %p44 = scmp.eq.s32.totalorder %s18, 0
    %p45 = por %p43, %p44
    %s47 = sadd.s32 %s46, 1
    %p50 = scmp.eq.s32.totalorder %s12, 3
    %p51 = scmp.ne.s32.totalorder %s46, %s48
    %p52 = scmp.eq.s32.totalorder %s12, 0
    %p53 = por %p51, %p52
    %p54 = scmp.ne.s32.totalorder %s46, %s48
    %p55 = scmp.eq.s32.totalorder %s17, 3
    %p56 = por %p54, %p55
    %p57 = scmp.ne.s32.totalorder %s48, %s49
    %p58 = scmp.eq.s32.totalorder %s17, 0
    %p59 = por %p57, %p58
    %p60 = scmp.ne.s32.totalorder %s48, %s49
    %p61 = scmp.eq.s32.totalorder %s18, 3
    %p62 = por %p60, %p61
    %p64 = scmp.ne.s32.totalorder %s49, %s63
    %p65 = scmp.eq.s32.totalorder %s18, 0
    %p66 = por %p64, %p65
    %s68 = sadd.s32 %s67, 1
    %p71 = scmp.eq.s32.totalorder %s12, 3
    %p72 = scmp.ne.s32.totalorder %s67, %s69
    %p73 = scmp.eq.s32.totalorder %s12, 0
    %p74 = por %p72, %p73
    %p75 = scmp.ne.s32.totalorder %s67, %s69
    %p76 = scmp.eq.s32.totalorder %s17, 3
    %p77 = por %p75, %p76
    %p78 = scmp.ne.s32.totalorder %s69, %s70
    %p79 = scmp.eq.s32.totalorder %s17, 0
    %p80 = por %p78, %p79
    %p81 = scmp.ne.s32.totalorder %s69, %s70
    %p82 = scmp.eq.s32.totalorder %s18, 3
    %p83 = por %p81, %p82
    %p85 = scmp.ne.s32.totalorder %s70, %s84
    %p86 = scmp.eq.s32.totalorder %s18, 0
    %p87 = por %p85, %p86
    %s89 = sadd.s32 %s88, 1
    %p92 = scmp.eq.s32.totalorder %s12, 3
    %p93 = scmp.ne.s32.totalorder %s88, %s90
    %p94 = scmp.eq.s32.totalorder %s12, 0
    %p95 = por %p93, %p94
    %p96 = scmp.ne.s32.totalorder %s88, %s90
    %p97 = scmp.eq.s32.totalorder %s17, 3
    %p98 = por %p96, %p97
    %p99 = scmp.ne.s32.totalorder %s90, %s91
    %p100 = scmp.eq.s32.totalorder %s17, 0
    %p101 = por %p99, %p100
    %p102 = scmp.ne.s32.totalorder %s90, %s91
    %p103 = scmp.eq.s32.totalorder %s18, 3
    %p104 = por %p102, %p103
    %p106 = scmp.ne.s32.totalorder %s91, %s105
    %p107 = scmp.eq.s32.totalorder %s18, 0
    %p108 = por %p106, %p107
    %s110 = sadd.s32 %s109, 1
    %p113 = scmp.eq.s32.totalorder %s12, 3
    %p114 = scmp.ne.s32.totalorder %s109, %s111
    %p115 = scmp.eq.s32.totalorder %s12, 0
    %p116 = por %p114, %p115
    %p117 = scmp.ne.s32.totalorder %s109, %s111
    %p118 = scmp.eq.s32.totalorder %s17, 3
    %p119 = por %p117, %p118
    %p120 = scmp.ne.s32.totalorder %s111, %s112
    %p121 = scmp.eq.s32.totalorder %s17, 0
    %p122 = por %p120, %p121
    %p123 = scmp.ne.s32.totalorder %s111, %s112
    %p124 = scmp.eq.s32.totalorder %s18, 3
    %p125 = por %p123, %p124
    %p127 = scmp.ne.s32.totalorder %s112, %s126
    %p128 = scmp.eq.s32.totalorder %s18, 0
    %p129 = por %p127, %p128
    %s131 = sadd.s32 %s130, 1
    %p134 = scmp.eq.s32.totalorder %s12, 3
    %p135 = scmp.ne.s32.totalorder %s130, %s132
    %p136 = scmp.eq.s32.totalorder %s12, 0
    %p137 = por %p135, %p136
    %p138 = scmp.ne.s32.totalorder %s130, %s132
    %p139 = scmp.eq.s32.totalorder %s17, 3
    %p140 = por %p138, %p139
    %p141 = scmp.ne.s32.totalorder %s132, %s133
    %p142 = scmp.eq.s32.totalorder %s17, 0
    %p143 = por %p141, %p142
    %p144 = scmp.ne.s32.totalorder %s132, %s133
    %p145 = scmp.eq.s32.totalorder %s18, 3
    %p146 = por %p144, %p145
    %p148 = scmp.ne.s32.totalorder %s133, %s147
    %p149 = scmp.eq.s32.totalorder %s18, 0
    %p150 = por %p148, %p149
    %s151 = ssub.s32 %s12, %s19
    %p152 = scmp.eq.s32.totalorder %s151, 0
    %s154 = sadd.s32 %s153, 1
    %s155 = scalar_select %p152, %s153, %s154
    %p158 = pneg %p152
    %p159 = scmp.eq.s32.totalorder %s12, 3
    %p160 = por %p158, %p159
    %p161 = scmp.ne.s32.totalorder %s153, %s156
    %p162 = scmp.eq.s32.totalorder %s12, 0
    %p163 = por %p161, %p162
    %p164 = scmp.ne.s32.totalorder %s153, %s156
    %p165 = scmp.eq.s32.totalorder %s17, 3
    %p166 = por %p164, %p165
    %p167 = scmp.ne.s32.totalorder %s156, %s157
    %p168 = scmp.eq.s32.totalorder %s17, 0
    %p169 = por %p167, %p168
    %p170 = scmp.ne.s32.totalorder %s156, %s157
    %p171 = scmp.eq.s32.totalorder %s18, 3
    %p172 = por %p170, %p171
    %p174 = scmp.ne.s32.totalorder %s157, %s173
    %p175 = scmp.eq.s32.totalorder %s18, 0
    %p176 = por %p174, %p175
    %p177 = scmp.le.s32.totalorder 1, %s12
    %p178 = scmp.lt.s32.totalorder %s12, 5
    %p179 = pnand %p177, %p178
    %p180 = pneg %p179
    // Predicated region
    $region9: #{tpu_custom_call.1} parent=5 // pred_check
      _
    $region10: #{tpu_custom_call.1} parent=5 // pred_check_branch
      %182 = sbr.rel (%p179) target = $region12
    $region11: #{tpu_custom_call.1} parent=5 // pred_region
      %s183 = ssub.s32 %s12, 1
      // Predicated region
      $region13: #{tpu_custom_call.1} parent=11 // pred_check
        %p184 = pneg %p59
      $region14: #{tpu_custom_call.1} parent=11 // pred_check_branch
        %186 = sbr.rel (%p184) target = $region16
      $region15: #{tpu_custom_call.1} parent=11 // pred_region
        _
      $region16: #{tpu_custom_call.1} parent=11 // pred_fallthru
        _
      // Predicated region
      $region17: #{tpu_custom_call.1} parent=11 // pred_check
        %p187 = pneg %p80
      $region18: #{tpu_custom_call.1} parent=11 // pred_check_branch
        %189 = sbr.rel (%p187) target = $region20
      $region19: #{tpu_custom_call.1} parent=11 // pred_region
        _
      $region20: #{tpu_custom_call.1} parent=11 // pred_fallthru
        _
      // Predicated region
      $region21: #{tpu_custom_call.1} parent=11 // pred_check
        %p190 = pneg %p101
      $region22: #{tpu_custom_call.1} parent=11 // pred_check_branch
        %192 = sbr.rel (%p190) target = $region24
      $region23: #{tpu_custom_call.1} parent=11 // pred_region
        _
      $region24: #{tpu_custom_call.1} parent=11 // pred_fallthru
        _
      // Predicated region
      $region25: #{tpu_custom_call.1} parent=11 // pred_check
        %p193 = pneg %p122
      $region26: #{tpu_custom_call.1} parent=11 // pred_check_branch
        %195 = sbr.rel (%p193) target = $region28
      $region27: #{tpu_custom_call.1} parent=11 // pred_region
        _
      $region28: #{tpu_custom_call.1} parent=11 // pred_fallthru
        _
      // Predicated region
      $region29: #{tpu_custom_call.1} parent=11 // pred_check
        %p196 = pneg %p143
      $region30: #{tpu_custom_call.1} parent=11 // pred_check_branch
        %198 = sbr.rel (%p196) target = $region32
      $region31: #{tpu_custom_call.1} parent=11 // pred_region
        _
      $region32: #{tpu_custom_call.1} parent=11 // pred_fallthru
        _
    $region12: #{tpu_custom_call.1} parent=5 // pred_fallthru
      _
    %p199 = scmp.lt.s32.totalorder %s12, 4
    // Predicated region
    $region33: #{tpu_custom_call.1} parent=5 // pred_check
      %p200 = pneg %p199
    $region34: #{tpu_custom_call.1} parent=5 // pred_check_branch
      %202 = sbr.rel (%p200) target = $region36
    $region35: #{tpu_custom_call.1} parent=5 // pred_region
      // Predicated region
      $region37: #{tpu_custom_call.1} parent=35 // pred_check
        %p203 = pneg %p32
      $region38: #{tpu_custom_call.1} parent=35 // pred_check_branch
        %205 = sbr.rel (%p203) target = $region40
      $region39: #{tpu_custom_call.1} parent=35 // pred_region
        %s206 = smul.u32 8, %s12
        %p207 = scmp.lt.s32.totalorder %s206, 31
        %s208 = scalar_select %p207, %s206, 31
        %s209 = smul.addr %s208, 8
        %s210 = scalar_lea.vmem %s0, %s209
        %s211 = smul.u32 8, %s12
      $region40: #{tpu_custom_call.1} parent=35 // pred_fallthru
        _
    $region36: #{tpu_custom_call.1} parent=5 // pred_fallthru
      _
    %p212 = scmp.le.s32.totalorder 1, %s12
    %p213 = scmp.lt.s32.totalorder %s12, 5
    %p214 = pnand %p212, %p213
    %p215 = pneg %p214
    // Predicated region
    $region41: #{tpu_custom_call.1} parent=5 // pred_check
      _
    $region42: #{tpu_custom_call.1} parent=5 // pred_check_branch
      %217 = sbr.rel (%p214) target = $region44
    $region43: #{tpu_custom_call.1} parent=5 // pred_region
      %s218 = ssub.s32 %s12, 1
      %s219 = smul.u32 8, %s17
      %p220 = scmp.lt.s32.totalorder %s219, 31
      %s221 = scalar_select %p220, %s219, 31
      %s222 = smul.addr %s221, 8
      %s223 = scalar_lea.vmem %s0, %s222
      %p224 = pneg %p38
      %p225 = pneg %p35
      %p226 = pneg %p59
      %p227 = pneg %p56
      %p228 = pneg %p80
      %p229 = pneg %p77
      %p230 = pneg %p101
      %p231 = pneg %p98
      %p232 = pneg %p122
      %p233 = pneg %p119
      %p234 = pneg %p143
      %p235 = pneg %p140
      %p236 = pneg %p169
      %p237 = pneg %p166
      %s238 = smul.u32 8, %s17
      %p239 = scmp.lt.s32.totalorder %s238, 31
      %s240 = scalar_select %p239, %s238, 31
      %s241 = smul.addr %s240, 8
      %s242 = scalar_lea.vmem %s6, %s241
      %s243 = smul.u32 8, %s17
      %p244 = scmp.lt.s32.totalorder %s243, 31
      %s245 = scalar_select %p244, %s243, 31
      %s246 = smul.addr %s245, 8
      %s247 = scalar_lea.vmem %s0, %s246
      %s248 = smul.u32 8, %s17
      %s249 = smul.u32 8, %s17
      %p250 = scmp.lt.s32.totalorder %s249, 31
      %s251 = scalar_select %p250, %s249, 31
      %s252 = smul.addr %s251, 8
      %s253 = scalar_lea.vmem %s6, %s252
      %s254 = smul.u32 8, %s17
      %v255 = vld [vmem:[%s247] sm:$0xff]
      %v256 = vld [vmem:[%s247 + $0x8] sm:$0xff]
      %v257 = vld [vmem:[%s247 + $0x10] sm:$0xff]
      %v258 = vld [vmem:[%s247 + $0x18] sm:$0xff]
      %v259 = vld [vmem:[%s247 + $0x20] sm:$0xff]
      %v260 = vld [vmem:[%s247 + $0x28] sm:$0xff]
      %v261 = vld [vmem:[%s247 + $0x30] sm:$0xff]
      %v262 = vld [vmem:[%s247 + $0x38] sm:$0xff]
      %v263 = vld [vmem:[%s1] sm:$0x3f]
      %vm264 = vcmask 48128
      %v266 = vsel %vm264, %v255, 0
      %v269 = vsel %vm264, %v256, 0
      %v272 = vsel %vm264, %v257, 0
      %v275 = vsel %vm264, %v258, 0
      %v278 = vsel %vm264, %v259, 0
      %v281 = vsel %vm264, %v260, 0
      %v284 = vsel %vm264, %v261, 0
      %v287 = vsel %vm264, %v262, 0
      %vm289 = vcmask 1045504
      %v291 = vsel %vm289, %v263, 0
      %293 = vmatprep.subr.mxu0 0.0
      %294 = vmatpush1.msra.mxu0 0.0
      %295 = vmatprep.subr.mxu0 0.0
      %296 = vmatpush1.msra.mxu0 0.0
      %297 = vmatprep.subr.mxu0 0.0
      %298 = vmatpush1.msra.mxu0 0.0
      %299 = vmatprep.subr.mxu0 0.0
      %300 = vmatpush1.msra.mxu0 0.0
      %301 = vmatprep.subr.mxu0 0.0
      %302 = vmatpush1.msra.mxu0 0.0
      %303 = vmatprep.subr.mxu0 0.0
      %304 = vmatpush1.msra.mxu0 0.0
      %305 = vmatprep.subr.mxu0 0.0
      %306 = vmatpush1.msra.mxu0 0.0
      %307 = vmatprep.subr.mxu0 0.0
      %308 = vmatpush1.msra.mxu0 0.0
      %309 = vmatprep.subr.mxu0 0.0
      %310 = vmatpush1.msra.mxu0 0.0
      %311 = vmatprep.subr.mxu0 0.0
      %312 = vmatpush1.msra.mxu0 0.0
      %313 = vmatprep.subr.mxu0 0.0
      %314 = vmatpush1.msra.mxu0 0.0
      %315 = vmatprep.subr.mxu0 0.0
      %316 = vmatpush1.msra.mxu0 0.0
      %317 = vmatprep.subr.mxu0 0.0
      %318 = vmatpush1.msra.mxu0 0.0
      %319 = vmatprep.subr.mxu0 0.0
      %320 = vmatpush1.msra.mxu0 0.0
      %321 = vmatprep.subr.mxu0 0.0
      %322 = vmatpush1.msra.mxu0 0.0
      %323 = vmatprep.subr.mxu0 0.0
      %v324 = vand.u32 %v291, 4294901760
      %325 = vmatpush1.msra.mxu0 %v324
      %326 = vmatprep.subr.mxu0 0.0
      %327 = vmatpush2.msra.mxu0 0.0
      %328 = vmatprep.subr.mxu0 0.0
      %329 = vmatpush2.msra.mxu0 0.0
      %330 = vmatprep.subr.mxu0 0.0
      %331 = vmatpush2.msra.mxu0 0.0
      %332 = vmatprep.subr.mxu0 0.0
      %333 = vmatpush2.msra.mxu0 0.0
      %334 = vmatprep.subr.mxu0 0.0
      %335 = vmatpush2.msra.mxu0 0.0
      %336 = vmatprep.subr.mxu0 0.0
      %337 = vmatpush2.msra.mxu0 0.0
      %338 = vmatprep.subr.mxu0 0.0
      %339 = vmatpush2.msra.mxu0 0.0
      %340 = vmatprep.subr.mxu0 0.0
      %341 = vmatpush2.msra.mxu0 0.0
      %342 = vmatprep.subr.mxu0 0.0
      %343 = vmatpush2.msra.mxu0 0.0
      %344 = vmatprep.subr.mxu0 0.0
      %345 = vmatpush2.msra.mxu0 0.0
      %346 = vmatprep.subr.mxu0 0.0
      %347 = vmatpush2.msra.mxu0 0.0
      %348 = vmatprep.subr.mxu0 0.0
      %349 = vmatpush2.msra.mxu0 0.0
      %350 = vmatprep.subr.mxu0 0.0
      %351 = vmatpush2.msra.mxu0 0.0
      %352 = vmatprep.subr.mxu0 0.0
      %353 = vmatpush2.msra.mxu0 0.0
      %354 = vmatprep.subr.mxu0 0.0
      %355 = vmatpush2.msra.mxu0 0.0
      %356 = vmatprep.subr.mxu0 0.0
      %357 = vmatpush2.msra.mxu0 0.0
      %358 = vmatprep.mubr.f32.mxu0 0.0
      %v359 = vand.u32 %v266, 4294901760
      %v360 = vsub.f32 %v266, %v359
      %v361 = vand.u32 %v360, 4294901760
      %v362 = vsub.f32 %v360, %v361
      %v363 = vand.u32 %v362, 4294901760
      %364 = vmatmul.mubr.f32.gmra.mxu0 %v363
      %v365 = vpop.f32.mrf.mxu0
      %v366 = vadd.f32 0.0, %v365
      %v367 = vpop.f32.mrf.mxu0
      %368 = vmatprep.mubr.f32.mxu0 0.0
      %v369 = vand.u32 %v269, 4294901760
      %v370 = vsub.f32 %v269, %v369
      %v371 = vand.u32 %v370, 4294901760
      %v372 = vsub.f32 %v370, %v371
      %v373 = vand.u32 %v372, 4294901760
      %374 = vmatmul.mubr.f32.gmra.mxu0 %v373
      %v375 = vpop.f32.mrf.mxu0
      %v376 = vadd.f32 0.0, %v375
      %v377 = vpop.f32.mrf.mxu0
      %378 = vmatprep.mubr.f32.mxu0 0.0
      %v379 = vand.u32 %v272, 4294901760
      %v380 = vsub.f32 %v272, %v379
      %v381 = vand.u32 %v380, 4294901760
      %v382 = vsub.f32 %v380, %v381
      %v383 = vand.u32 %v382, 4294901760
      %384 = vmatmul.mubr.f32.gmra.mxu0 %v383
      %v385 = vpop.f32.mrf.mxu0
      %v386 = vadd.f32 0.0, %v385
      %v387 = vpop.f32.mrf.mxu0
      %388 = vmatprep.mubr.f32.mxu0 0.0
      %v389 = vand.u32 %v275, 4294901760
      %v390 = vsub.f32 %v275, %v389
      %v391 = vand.u32 %v390, 4294901760
      %v392 = vsub.f32 %v390, %v391
      %v393 = vand.u32 %v392, 4294901760
      %394 = vmatmul.mubr.f32.gmra.mxu0 %v393
      %v395 = vpop.f32.mrf.mxu0
      %v396 = vadd.f32 0.0, %v395
      %v397 = vpop.f32.mrf.mxu0
      %398 = vmatprep.mubr.f32.mxu0 0.0
      %v399 = vand.u32 %v278, 4294901760
      %v400 = vsub.f32 %v278, %v399
      %v401 = vand.u32 %v400, 4294901760
      %v402 = vsub.f32 %v400, %v401
      %v403 = vand.u32 %v402, 4294901760
      %404 = vmatmul.mubr.f32.gmra.mxu0 %v403
      %v405 = vpop.f32.mrf.mxu0
      %v406 = vadd.f32 0.0, %v405
      %v407 = vpop.f32.mrf.mxu0
      %408 = vmatprep.mubr.f32.mxu0 0.0
      %v409 = vand.u32 %v281, 4294901760
      %v410 = vsub.f32 %v281, %v409
      %v411 = vand.u32 %v410, 4294901760
      %v412 = vsub.f32 %v410, %v411
      %v413 = vand.u32 %v412, 4294901760
      %414 = vmatmul.mubr.f32.gmra.mxu0 %v413
      %v415 = vpop.f32.mrf.mxu0
      %v416 = vadd.f32 0.0, %v415
      %v417 = vpop.f32.mrf.mxu0
      %418 = vmatprep.mubr.f32.mxu0 0.0
      %v419 = vand.u32 %v284, 4294901760
      %v420 = vsub.f32 %v284, %v419
      %v421 = vand.u32 %v420, 4294901760
      %v422 = vsub.f32 %v420, %v421
      %v423 = vand.u32 %v422, 4294901760
      %424 = vmatmul.mubr.f32.gmra.mxu0 %v423
      %v425 = vpop.f32.mrf.mxu0
      %v426 = vadd.f32 0.0, %v425
      %v427 = vpop.f32.mrf.mxu0
      %428 = vmatprep.mubr.f32.mxu0 0.0
      %v429 = vand.u32 %v287, 4294901760
      %v430 = vsub.f32 %v287, %v429
      %v431 = vand.u32 %v430, 4294901760
      %v432 = vsub.f32 %v430, %v431
      %v433 = vand.u32 %v432, 4294901760
      %434 = vmatmul.mubr.f32.gmra.mxu0 %v433
      %v435 = vpop.f32.mrf.mxu0
      %v436 = vadd.f32 0.0, %v435
      %v437 = vpop.f32.mrf.mxu0
      %438 = vdwg.mxu0
      %439 = vmatprep.subr.mxu0 0.0
      %440 = vmatpush1.msra.mxu0 0.0
      %441 = vmatprep.subr.mxu0 0.0
      %442 = vmatpush1.msra.mxu0 0.0
      %443 = vmatprep.subr.mxu0 0.0
      %444 = vmatpush1.msra.mxu0 0.0
      %445 = vmatprep.subr.mxu0 0.0
      %446 = vmatpush1.msra.mxu0 0.0
      %447 = vmatprep.subr.mxu0 0.0
      %448 = vmatpush1.msra.mxu0 0.0
      %449 = vmatprep.subr.mxu0 0.0
      %450 = vmatpush1.msra.mxu0 0.0
      %451 = vmatprep.subr.mxu0 0.0
      %452 = vmatpush1.msra.mxu0 0.0
      %453 = vmatprep.subr.mxu0 0.0
      %454 = vmatpush1.msra.mxu0 0.0
      %455 = vmatprep.subr.mxu0 0.0
      %456 = vmatpush1.msra.mxu0 0.0
      %457 = vmatprep.subr.mxu0 0.0
      %458 = vmatpush1.msra.mxu0 0.0
      %459 = vmatprep.subr.mxu0 0.0
      %460 = vmatpush1.msra.mxu0 0.0
      %461 = vmatprep.subr.mxu0 0.0
      %462 = vmatpush1.msra.mxu0 0.0
      %463 = vmatprep.subr.mxu0 0.0
      %464 = vmatpush1.msra.mxu0 0.0
      %465 = vmatprep.subr.mxu0 0.0
      %466 = vmatpush1.msra.mxu0 0.0
      %467 = vmatprep.subr.mxu0 0.0
      %468 = vmatpush1.msra.mxu0 0.0
      %469 = vmatprep.subr.mxu0 0.0
      %v470 = vand.u32 %v291, 4294901760
      %v471 = vsub.f32 %v291, %v470
      %v472 = vand.u32 %v471, 4294901760
      %v473 = vsub.f32 %v471, %v472
      %v474 = vand.u32 %v473, 4294901760
      %475 = vmatpush1.msra.mxu0 %v474
      %476 = vmatprep.subr.mxu0 0.0
      %477 = vmatpush2.msra.mxu0 0.0
      %478 = vmatprep.subr.mxu0 0.0
      %479 = vmatpush2.msra.mxu0 0.0
      %480 = vmatprep.subr.mxu0 0.0
      %481 = vmatpush2.msra.mxu0 0.0
      %482 = vmatprep.subr.mxu0 0.0
      %483 = vmatpush2.msra.mxu0 0.0
      %484 = vmatprep.subr.mxu0 0.0
      %485 = vmatpush2.msra.mxu0 0.0
      %486 = vmatprep.subr.mxu0 0.0
      %487 = vmatpush2.msra.mxu0 0.0
      %488 = vmatprep.subr.mxu0 0.0
      %489 = vmatpush2.msra.mxu0 0.0
      %490 = vmatprep.subr.mxu0 0.0
      %491 = vmatpush2.msra.mxu0 0.0
      %492 = vmatprep.subr.mxu0 0.0
      %493 = vmatpush2.msra.mxu0 0.0
      %494 = vmatprep.subr.mxu0 0.0
      %495 = vmatpush2.msra.mxu0 0.0
      %496 = vmatprep.subr.mxu0 0.0
      %497 = vmatpush2.msra.mxu0 0.0
      %498 = vmatprep.subr.mxu0 0.0
      %499 = vmatpush2.msra.mxu0 0.0
      %500 = vmatprep.subr.mxu0 0.0
      %501 = vmatpush2.msra.mxu0 0.0
      %502 = vmatprep.subr.mxu0 0.0
      %503 = vmatpush2.msra.mxu0 0.0
      %504 = vmatprep.subr.mxu0 0.0
      %505 = vmatpush2.msra.mxu0 0.0
      %506 = vmatprep.subr.mxu0 0.0
      %507 = vmatpush2.msra.mxu0 0.0
      %508 = vmatprep.mubr.f32.mxu0 0.0
      %v509 = vand.u32 %v266, 4294901760
      %510 = vmatmul.mubr.f32.gmra.mxu0 %v509
      %v511 = vpop.f32.mrf.mxu0
      %v512 = vadd.f32 %v366, %v511
      %v513 = vpop.f32.mrf.mxu0
      %514 = vmatprep.mubr.f32.mxu0 0.0
      %v515 = vand.u32 %v269, 4294901760
      %516 = vmatmul.mubr.f32.gmra.mxu0 %v515
      %v517 = vpop.f32.mrf.mxu0
      %v518 = vadd.f32 %v376, %v517
      %v519 = vpop.f32.mrf.mxu0
      %520 = vmatprep.mubr.f32.mxu0 0.0
      %v521 = vand.u32 %v272, 4294901760
      %522 = vmatmul.mubr.f32.gmra.mxu0 %v521
      %v523 = vpop.f32.mrf.mxu0
      %v524 = vadd.f32 %v386, %v523
      %v525 = vpop.f32.mrf.mxu0
      %526 = vmatprep.mubr.f32.mxu0 0.0
      %v527 = vand.u32 %v275, 4294901760
      %528 = vmatmul.mubr.f32.gmra.mxu0 %v527
      %v529 = vpop.f32.mrf.mxu0
      %v530 = vadd.f32 %v396, %v529
      %v531 = vpop.f32.mrf.mxu0
      %532 = vmatprep.mubr.f32.mxu0 0.0
      %v533 = vand.u32 %v278, 4294901760
      %534 = vmatmul.mubr.f32.gmra.mxu0 %v533
      %v535 = vpop.f32.mrf.mxu0
      %v536 = vadd.f32 %v406, %v535
      %v537 = vpop.f32.mrf.mxu0
      %538 = vmatprep.mubr.f32.mxu0 0.0
      %v539 = vand.u32 %v281, 4294901760
      %540 = vmatmul.mubr.f32.gmra.mxu0 %v539
      %v541 = vpop.f32.mrf.mxu0
      %v542 = vadd.f32 %v416, %v541
      %v543 = vpop.f32.mrf.mxu0
      %544 = vmatprep.mubr.f32.mxu0 0.0
      %v545 = vand.u32 %v284, 4294901760
      %546 = vmatmul.mubr.f32.gmra.mxu0 %v545
      %v547 = vpop.f32.mrf.mxu0
      %v548 = vadd.f32 %v426, %v547
      %v549 = vpop.f32.mrf.mxu0
      %550 = vmatprep.mubr.f32.mxu0 0.0
      %v551 = vand.u32 %v287, 4294901760
      %552 = vmatmul.mubr.f32.gmra.mxu0 %v551
      %v553 = vpop.f32.mrf.mxu0
      %v554 = vadd.f32 %v436, %v553
      %v555 = vpop.f32.mrf.mxu0
      %556 = vdwg.mxu0
      %557 = vmatprep.subr.mxu0 0.0
      %558 = vmatpush1.msra.mxu0 0.0
      %559 = vmatprep.subr.mxu0 0.0
      %560 = vmatpush1.msra.mxu0 0.0
      %561 = vmatprep.subr.mxu0 0.0
      %562 = vmatpush1.msra.mxu0 0.0
      %563 = vmatprep.subr.mxu0 0.0
      %564 = vmatpush1.msra.mxu0 0.0
      %565 = vmatprep.subr.mxu0 0.0
      %566 = vmatpush1.msra.mxu0 0.0
      %567 = vmatprep.subr.mxu0 0.0
      %568 = vmatpush1.msra.mxu0 0.0
      %569 = vmatprep.subr.mxu0 0.0
      %570 = vmatpush1.msra.mxu0 0.0
      %571 = vmatprep.subr.mxu0 0.0
      %572 = vmatpush1.msra.mxu0 0.0
      %573 = vmatprep.subr.mxu0 0.0
      %574 = vmatpush1.msra.mxu0 0.0
      %575 = vmatprep.subr.mxu0 0.0
      %576 = vmatpush1.msra.mxu0 0.0
      %577 = vmatprep.subr.mxu0 0.0
      %578 = vmatpush1.msra.mxu0 0.0
      %579 = vmatprep.subr.mxu0 0.0
      %580 = vmatpush1.msra.mxu0 0.0
      %581 = vmatprep.subr.mxu0 0.0
      %582 = vmatpush1.msra.mxu0 0.0
      %583 = vmatprep.subr.mxu0 0.0
      %584 = vmatpush1.msra.mxu0 0.0
      %585 = vmatprep.subr.mxu0 0.0
      %586 = vmatpush1.msra.mxu0 0.0
      %587 = vmatprep.subr.mxu0 0.0
      %v588 = vand.u32 %v291, 4294901760
      %v589 = vsub.f32 %v291, %v588
      %590 = vmatpush1.msra.mxu0 %v589
      %591 = vmatprep.subr.mxu0 0.0
      %592 = vmatpush2.msra.mxu0 0.0
      %593 = vmatprep.subr.mxu0 0.0
      %594 = vmatpush2.msra.mxu0 0.0
      %595 = vmatprep.subr.mxu0 0.0
      %596 = vmatpush2.msra.mxu0 0.0
      %597 = vmatprep.subr.mxu0 0.0
      %598 = vmatpush2.msra.mxu0 0.0
      %599 = vmatprep.subr.mxu0 0.0
      %600 = vmatpush2.msra.mxu0 0.0
      %601 = vmatprep.subr.mxu0 0.0
      %602 = vmatpush2.msra.mxu0 0.0
      %603 = vmatprep.subr.mxu0 0.0
      %604 = vmatpush2.msra.mxu0 0.0
      %605 = vmatprep.subr.mxu0 0.0
      %606 = vmatpush2.msra.mxu0 0.0
      %607 = vmatprep.subr.mxu0 0.0
      %608 = vmatpush2.msra.mxu0 0.0
      %609 = vmatprep.subr.mxu0 0.0
      %610 = vmatpush2.msra.mxu0 0.0
      %611 = vmatprep.subr.mxu0 0.0
      %612 = vmatpush2.msra.mxu0 0.0
      %613 = vmatprep.subr.mxu0 0.0
      %614 = vmatpush2.msra.mxu0 0.0
      %615 = vmatprep.subr.mxu0 0.0
      %616 = vmatpush2.msra.mxu0 0.0
      %617 = vmatprep.subr.mxu0 0.0
      %618 = vmatpush2.msra.mxu0 0.0
      %619 = vmatprep.subr.mxu0 0.0
      %620 = vmatpush2.msra.mxu0 0.0
      %621 = vmatprep.subr.mxu0 0.0
      %622 = vmatpush2.msra.mxu0 0.0
      %623 = vmatprep.mubr.f32.mxu0 0.0
      %v624 = vand.u32 %v266, 4294901760
      %v625 = vsub.f32 %v266, %v624
      %626 = vmatmul.mubr.f32.gmra.mxu0 %v625
      %v627 = vpop.f32.mrf.mxu0
      %v628 = vadd.f32 %v512, %v627
      %v629 = vpop.f32.mrf.mxu0
      %630 = vmatprep.mubr.f32.mxu0 0.0
      %v631 = vand.u32 %v269, 4294901760
      %v632 = vsub.f32 %v269, %v631
      %633 = vmatmul.mubr.f32.gmra.mxu0 %v632
      %v634 = vpop.f32.mrf.mxu0
      %v635 = vadd.f32 %v518, %v634
      %v636 = vpop.f32.mrf.mxu0
      %637 = vmatprep.mubr.f32.mxu0 0.0
      %v638 = vand.u32 %v272, 4294901760
      %v639 = vsub.f32 %v272, %v638
      %640 = vmatmul.mubr.f32.gmra.mxu0 %v639
      %v641 = vpop.f32.mrf.mxu0
      %v642 = vadd.f32 %v524, %v641
      %v643 = vpop.f32.mrf.mxu0
      %644 = vmatprep.mubr.f32.mxu0 0.0
      %v645 = vand.u32 %v275, 4294901760
      %v646 = vsub.f32 %v275, %v645
      %647 = vmatmul.mubr.f32.gmra.mxu0 %v646
      %v648 = vpop.f32.mrf.mxu0
      %v649 = vadd.f32 %v530, %v648
      %v650 = vpop.f32.mrf.mxu0
      %651 = vmatprep.mubr.f32.mxu0 0.0
      %v652 = vand.u32 %v278, 4294901760
      %v653 = vsub.f32 %v278, %v652
      %654 = vmatmul.mubr.f32.gmra.mxu0 %v653
      %v655 = vpop.f32.mrf.mxu0
      %v656 = vadd.f32 %v536, %v655
      %v657 = vpop.f32.mrf.mxu0
      %658 = vmatprep.mubr.f32.mxu0 0.0
      %v659 = vand.u32 %v281, 4294901760
      %v660 = vsub.f32 %v281, %v659
      %661 = vmatmul.mubr.f32.gmra.mxu0 %v660
      %v662 = vpop.f32.mrf.mxu0
      %v663 = vadd.f32 %v542, %v662
      %v664 = vpop.f32.mrf.mxu0
      %665 = vmatprep.mubr.f32.mxu0 0.0
      %v666 = vand.u32 %v284, 4294901760
      %v667 = vsub.f32 %v284, %v666
      %668 = vmatmul.mubr.f32.gmra.mxu0 %v667
      %v669 = vpop.f32.mrf.mxu0
      %v670 = vadd.f32 %v548, %v669
      %v671 = vpop.f32.mrf.mxu0
      %672 = vmatprep.mubr.f32.mxu0 0.0
      %v673 = vand.u32 %v287, 4294901760
      %v674 = vsub.f32 %v287, %v673
      %675 = vmatmul.mubr.f32.gmra.mxu0 %v674
      %v676 = vpop.f32.mrf.mxu0
      %v677 = vadd.f32 %v554, %v676
      %v678 = vpop.f32.mrf.mxu0
      %679 = vdwg.mxu0
      %680 = vmatprep.subr.mxu0 0.0
      %681 = vmatpush1.msra.mxu0 0.0
      %682 = vmatprep.subr.mxu0 0.0
      %683 = vmatpush1.msra.mxu0 0.0
      %684 = vmatprep.subr.mxu0 0.0
      %685 = vmatpush1.msra.mxu0 0.0
      %686 = vmatprep.subr.mxu0 0.0
      %687 = vmatpush1.msra.mxu0 0.0
      %688 = vmatprep.subr.mxu0 0.0
      %689 = vmatpush1.msra.mxu0 0.0
      %690 = vmatprep.subr.mxu0 0.0
      %691 = vmatpush1.msra.mxu0 0.0
      %692 = vmatprep.subr.mxu0 0.0
      %693 = vmatpush1.msra.mxu0 0.0
      %694 = vmatprep.subr.mxu0 0.0
      %695 = vmatpush1.msra.mxu0 0.0
      %696 = vmatprep.subr.mxu0 0.0
      %697 = vmatpush1.msra.mxu0 0.0
      %698 = vmatprep.subr.mxu0 0.0
      %699 = vmatpush1.msra.mxu0 0.0
      %700 = vmatprep.subr.mxu0 0.0
      %701 = vmatpush1.msra.mxu0 0.0
      %702 = vmatprep.subr.mxu0 0.0
      %703 = vmatpush1.msra.mxu0 0.0
      %704 = vmatprep.subr.mxu0 0.0
      %705 = vmatpush1.msra.mxu0 0.0
      %706 = vmatprep.subr.mxu0 0.0
      %707 = vmatpush1.msra.mxu0 0.0
      %708 = vmatprep.subr.mxu0 0.0
      %709 = vmatpush1.msra.mxu0 0.0
      %710 = vmatprep.subr.mxu0 0.0
      %v711 = vand.u32 %v291, 4294901760
      %712 = vmatpush1.msra.mxu0 %v711
      %713 = vmatprep.subr.mxu0 0.0
      %714 = vmatpush2.msra.mxu0 0.0
      %715 = vmatprep.subr.mxu0 0.0
      %716 = vmatpush2.msra.mxu0 0.0
      %717 = vmatprep.subr.mxu0 0.0
      %718 = vmatpush2.msra.mxu0 0.0
      %719 = vmatprep.subr.mxu0 0.0
      %720 = vmatpush2.msra.mxu0 0.0
      %721 = vmatprep.subr.mxu0 0.0
      %722 = vmatpush2.msra.mxu0 0.0
      %723 = vmatprep.subr.mxu0 0.0
      %724 = vmatpush2.msra.mxu0 0.0
      %725 = vmatprep.subr.mxu0 0.0
      %726 = vmatpush2.msra.mxu0 0.0
      %727 = vmatprep.subr.mxu0 0.0
      %728 = vmatpush2.msra.mxu0 0.0
      %729 = vmatprep.subr.mxu0 0.0
      %730 = vmatpush2.msra.mxu0 0.0
      %731 = vmatprep.subr.mxu0 0.0
      %732 = vmatpush2.msra.mxu0 0.0
      %733 = vmatprep.subr.mxu0 0.0
      %734 = vmatpush2.msra.mxu0 0.0
      %735 = vmatprep.subr.mxu0 0.0
      %736 = vmatpush2.msra.mxu0 0.0
      %737 = vmatprep.subr.mxu0 0.0
      %738 = vmatpush2.msra.mxu0 0.0
      %739 = vmatprep.subr.mxu0 0.0
      %740 = vmatpush2.msra.mxu0 0.0
      %741 = vmatprep.subr.mxu0 0.0
      %742 = vmatpush2.msra.mxu0 0.0
      %743 = vmatprep.subr.mxu0 0.0
      %744 = vmatpush2.msra.mxu0 0.0
      %745 = vmatprep.mubr.f32.mxu0 0.0
      %v746 = vand.u32 %v266, 4294901760
      %v747 = vsub.f32 %v266, %v746
      %v748 = vand.u32 %v747, 4294901760
      %749 = vmatmul.mubr.f32.gmra.mxu0 %v748
      %v750 = vpop.f32.mrf.mxu0
      %v751 = vadd.f32 %v628, %v750
      %v752 = vpop.f32.mrf.mxu0
      %753 = vmatprep.mubr.f32.mxu0 0.0
      %v754 = vand.u32 %v269, 4294901760
      %v755 = vsub.f32 %v269, %v754
      %v756 = vand.u32 %v755, 4294901760
      %757 = vmatmul.mubr.f32.gmra.mxu0 %v756
      %v758 = vpop.f32.mrf.mxu0
      %v759 = vadd.f32 %v635, %v758
      %v760 = vpop.f32.mrf.mxu0
      %761 = vmatprep.mubr.f32.mxu0 0.0
      %v762 = vand.u32 %v272, 4294901760
      %v763 = vsub.f32 %v272, %v762
      %v764 = vand.u32 %v763, 4294901760
      %765 = vmatmul.mubr.f32.gmra.mxu0 %v764
      %v766 = vpop.f32.mrf.mxu0
      %v767 = vadd.f32 %v642, %v766
      %v768 = vpop.f32.mrf.mxu0
      %769 = vmatprep.mubr.f32.mxu0 0.0
      %v770 = vand.u32 %v275, 4294901760
      %v771 = vsub.f32 %v275, %v770
      %v772 = vand.u32 %v771, 4294901760
      %773 = vmatmul.mubr.f32.gmra.mxu0 %v772
      %v774 = vpop.f32.mrf.mxu0
      %v775 = vadd.f32 %v649, %v774
      %v776 = vpop.f32.mrf.mxu0
      %777 = vmatprep.mubr.f32.mxu0 0.0
      %v778 = vand.u32 %v278, 4294901760
      %v779 = vsub.f32 %v278, %v778
      %v780 = vand.u32 %v779, 4294901760
      %781 = vmatmul.mubr.f32.gmra.mxu0 %v780
      %v782 = vpop.f32.mrf.mxu0
      %v783 = vadd.f32 %v656, %v782
      %v784 = vpop.f32.mrf.mxu0
      %785 = vmatprep.mubr.f32.mxu0 0.0
      %v786 = vand.u32 %v281, 4294901760
      %v787 = vsub.f32 %v281, %v786
      %v788 = vand.u32 %v787, 4294901760
      %789 = vmatmul.mubr.f32.gmra.mxu0 %v788
      %v790 = vpop.f32.mrf.mxu0
      %v791 = vadd.f32 %v663, %v790
      %v792 = vpop.f32.mrf.mxu0
      %793 = vmatprep.mubr.f32.mxu0 0.0
      %v794 = vand.u32 %v284, 4294901760
      %v795 = vsub.f32 %v284, %v794
      %v796 = vand.u32 %v795, 4294901760
      %797 = vmatmul.mubr.f32.gmra.mxu0 %v796
      %v798 = vpop.f32.mrf.mxu0
      %v799 = vadd.f32 %v670, %v798
      %v800 = vpop.f32.mrf.mxu0
      %801 = vmatprep.mubr.f32.mxu0 0.0
      %v802 = vand.u32 %v287, 4294901760
      %v803 = vsub.f32 %v287, %v802
      %v804 = vand.u32 %v803, 4294901760
      %805 = vmatmul.mubr.f32.gmra.mxu0 %v804
      %v806 = vpop.f32.mrf.mxu0
      %v807 = vadd.f32 %v677, %v806
      %v808 = vpop.f32.mrf.mxu0
      %809 = vdwg.mxu0
      %810 = vmatprep.subr.mxu0 0.0
      %811 = vmatpush1.msra.mxu0 0.0
      %812 = vmatprep.subr.mxu0 0.0
      %813 = vmatpush1.msra.mxu0 0.0
      %814 = vmatprep.subr.mxu0 0.0
      %815 = vmatpush1.msra.mxu0 0.0
      %816 = vmatprep.subr.mxu0 0.0
      %817 = vmatpush1.msra.mxu0 0.0
      %818 = vmatprep.subr.mxu0 0.0
      %819 = vmatpush1.msra.mxu0 0.0
      %820 = vmatprep.subr.mxu0 0.0
      %821 = vmatpush1.msra.mxu0 0.0
      %822 = vmatprep.subr.mxu0 0.0
      %823 = vmatpush1.msra.mxu0 0.0
      %824 = vmatprep.subr.mxu0 0.0
      %825 = vmatpush1.msra.mxu0 0.0
      %826 = vmatprep.subr.mxu0 0.0
      %827 = vmatpush1.msra.mxu0 0.0
      %828 = vmatprep.subr.mxu0 0.0
      %829 = vmatpush1.msra.mxu0 0.0
      %830 = vmatprep.subr.mxu0 0.0
      %831 = vmatpush1.msra.mxu0 0.0
      %832 = vmatprep.subr.mxu0 0.0
      %833 = vmatpush1.msra.mxu0 0.0
      %834 = vmatprep.subr.mxu0 0.0
      %835 = vmatpush1.msra.mxu0 0.0
      %836 = vmatprep.subr.mxu0 0.0
      %837 = vmatpush1.msra.mxu0 0.0
      %838 = vmatprep.subr.mxu0 0.0
      %839 = vmatpush1.msra.mxu0 0.0
      %840 = vmatprep.subr.mxu0 0.0
      %v841 = vand.u32 %v291, 4294901760
      %v842 = vsub.f32 %v291, %v841
      %v843 = vand.u32 %v842, 4294901760
      %844 = vmatpush1.msra.mxu0 %v843
      %845 = vmatprep.subr.mxu0 0.0
      %846 = vmatpush2.msra.mxu0 0.0
      %847 = vmatprep.subr.mxu0 0.0
      %848 = vmatpush2.msra.mxu0 0.0
      %849 = vmatprep.subr.mxu0 0.0
      %850 = vmatpush2.msra.mxu0 0.0
      %851 = vmatprep.subr.mxu0 0.0
      %852 = vmatpush2.msra.mxu0 0.0
      %853 = vmatprep.subr.mxu0 0.0
      %854 = vmatpush2.msra.mxu0 0.0
      %855 = vmatprep.subr.mxu0 0.0
      %856 = vmatpush2.msra.mxu0 0.0
      %857 = vmatprep.subr.mxu0 0.0
      %858 = vmatpush2.msra.mxu0 0.0
      %859 = vmatprep.subr.mxu0 0.0
      %860 = vmatpush2.msra.mxu0 0.0
      %861 = vmatprep.subr.mxu0 0.0
      %862 = vmatpush2.msra.mxu0 0.0
      %863 = vmatprep.subr.mxu0 0.0
      %864 = vmatpush2.msra.mxu0 0.0
      %865 = vmatprep.subr.mxu0 0.0
      %866 = vmatpush2.msra.mxu0 0.0
      %867 = vmatprep.subr.mxu0 0.0
      %868 = vmatpush2.msra.mxu0 0.0
      %869 = vmatprep.subr.mxu0 0.0
      %870 = vmatpush2.msra.mxu0 0.0
      %871 = vmatprep.subr.mxu0 0.0
      %872 = vmatpush2.msra.mxu0 0.0
      %873 = vmatprep.subr.mxu0 0.0
      %874 = vmatpush2.msra.mxu0 0.0
      %875 = vmatprep.subr.mxu0 0.0
      %876 = vmatpush2.msra.mxu0 0.0
      %877 = vmatprep.mubr.f32.mxu0 0.0
      %v878 = vand.u32 %v266, 4294901760
      %879 = vmatmul.mubr.f32.gmra.mxu0 %v878
      %v880 = vpop.f32.mrf.mxu0
      %v881 = vadd.f32 %v751, %v880
      %v882 = vpop.f32.mrf.mxu0
      %883 = vmatprep.mubr.f32.mxu0 0.0
      %v884 = vand.u32 %v269, 4294901760
      %885 = vmatmul.mubr.f32.gmra.mxu0 %v884
      %v886 = vpop.f32.mrf.mxu0
      %v887 = vadd.f32 %v759, %v886
      %v888 = vpop.f32.mrf.mxu0
      %889 = vmatprep.mubr.f32.mxu0 0.0
      %v890 = vand.u32 %v272, 4294901760
      %891 = vmatmul.mubr.f32.gmra.mxu0 %v890
      %v892 = vpop.f32.mrf.mxu0
      %v893 = vadd.f32 %v767, %v892
      %v894 = vpop.f32.mrf.mxu0
      %895 = vmatprep.mubr.f32.mxu0 0.0
      %v896 = vand.u32 %v275, 4294901760
      %897 = vmatmul.mubr.f32.gmra.mxu0 %v896
      %v898 = vpop.f32.mrf.mxu0
      %v899 = vadd.f32 %v775, %v898
      %v900 = vpop.f32.mrf.mxu0
      %901 = vmatprep.mubr.f32.mxu0 0.0
      %v902 = vand.u32 %v278, 4294901760
      %903 = vmatmul.mubr.f32.gmra.mxu0 %v902
      %v904 = vpop.f32.mrf.mxu0
      %v905 = vadd.f32 %v783, %v904
      %v906 = vpop.f32.mrf.mxu0
      %907 = vmatprep.mubr.f32.mxu0 0.0
      %v908 = vand.u32 %v281, 4294901760
      %909 = vmatmul.mubr.f32.gmra.mxu0 %v908
      %v910 = vpop.f32.mrf.mxu0
      %v911 = vadd.f32 %v791, %v910
      %v912 = vpop.f32.mrf.mxu0
      %913 = vmatprep.mubr.f32.mxu0 0.0
      %v914 = vand.u32 %v284, 4294901760
      %915 = vmatmul.mubr.f32.gmra.mxu0 %v914
      %v916 = vpop.f32.mrf.mxu0
      %v917 = vadd.f32 %v799, %v916
      %v918 = vpop.f32.mrf.mxu0
      %919 = vmatprep.mubr.f32.mxu0 0.0
      %v920 = vand.u32 %v287, 4294901760
      %921 = vmatmul.mubr.f32.gmra.mxu0 %v920
      %v922 = vpop.f32.mrf.mxu0
      %v923 = vadd.f32 %v807, %v922
      %v924 = vpop.f32.mrf.mxu0
      %925 = vdwg.mxu0
      %926 = vmatprep.subr.mxu0 0.0
      %927 = vmatpush1.msra.mxu0 0.0
      %928 = vmatprep.subr.mxu0 0.0
      %929 = vmatpush1.msra.mxu0 0.0
      %930 = vmatprep.subr.mxu0 0.0
      %931 = vmatpush1.msra.mxu0 0.0
      %932 = vmatprep.subr.mxu0 0.0
      %933 = vmatpush1.msra.mxu0 0.0
      %934 = vmatprep.subr.mxu0 0.0
      %935 = vmatpush1.msra.mxu0 0.0
      %936 = vmatprep.subr.mxu0 0.0
      %937 = vmatpush1.msra.mxu0 0.0
      %938 = vmatprep.subr.mxu0 0.0
      %939 = vmatpush1.msra.mxu0 0.0
      %940 = vmatprep.subr.mxu0 0.0
      %941 = vmatpush1.msra.mxu0 0.0
      %942 = vmatprep.subr.mxu0 0.0
      %943 = vmatpush1.msra.mxu0 0.0
      %944 = vmatprep.subr.mxu0 0.0
      %945 = vmatpush1.msra.mxu0 0.0
      %946 = vmatprep.subr.mxu0 0.0
      %947 = vmatpush1.msra.mxu0 0.0
      %948 = vmatprep.subr.mxu0 0.0
      %949 = vmatpush1.msra.mxu0 0.0
      %950 = vmatprep.subr.mxu0 0.0
      %951 = vmatpush1.msra.mxu0 0.0
      %952 = vmatprep.subr.mxu0 0.0
      %953 = vmatpush1.msra.mxu0 0.0
      %954 = vmatprep.subr.mxu0 0.0
      %955 = vmatpush1.msra.mxu0 0.0
      %956 = vmatprep.subr.mxu0 0.0
      %v957 = vand.u32 %v291, 4294901760
      %958 = vmatpush1.msra.mxu0 %v957
      %959 = vmatprep.subr.mxu0 0.0
      %960 = vmatpush2.msra.mxu0 0.0
      %961 = vmatprep.subr.mxu0 0.0
      %962 = vmatpush2.msra.mxu0 0.0
      %963 = vmatprep.subr.mxu0 0.0
      %964 = vmatpush2.msra.mxu0 0.0
      %965 = vmatprep.subr.mxu0 0.0
      %966 = vmatpush2.msra.mxu0 0.0
      %967 = vmatprep.subr.mxu0 0.0
      %968 = vmatpush2.msra.mxu0 0.0
      %969 = vmatprep.subr.mxu0 0.0
      %970 = vmatpush2.msra.mxu0 0.0
      %971 = vmatprep.subr.mxu0 0.0
      %972 = vmatpush2.msra.mxu0 0.0
      %973 = vmatprep.subr.mxu0 0.0
      %974 = vmatpush2.msra.mxu0 0.0
      %975 = vmatprep.subr.mxu0 0.0
      %976 = vmatpush2.msra.mxu0 0.0
      %977 = vmatprep.subr.mxu0 0.0
      %978 = vmatpush2.msra.mxu0 0.0
      %979 = vmatprep.subr.mxu0 0.0
      %980 = vmatpush2.msra.mxu0 0.0
      %981 = vmatprep.subr.mxu0 0.0
      %982 = vmatpush2.msra.mxu0 0.0
      %983 = vmatprep.subr.mxu0 0.0
      %984 = vmatpush2.msra.mxu0 0.0
      %985 = vmatprep.subr.mxu0 0.0
      %986 = vmatpush2.msra.mxu0 0.0
      %987 = vmatprep.subr.mxu0 0.0
      %988 = vmatpush2.msra.mxu0 0.0
      %989 = vmatprep.subr.mxu0 0.0
      %990 = vmatpush2.msra.mxu0 0.0
      %991 = vmatprep.mubr.f32.mxu0 0.0
      %v992 = vand.u32 %v266, 4294901760
      %993 = vmatmul.mubr.f32.gmra.mxu0 %v992
      %v994 = vpop.f32.mrf.mxu0
      %v995 = vadd.f32 %v881, %v994
      %v996 = vpop.f32.mrf.mxu0
      %997 = vmatprep.mubr.f32.mxu0 0.0
      %v998 = vand.u32 %v269, 4294901760
      %999 = vmatmul.mubr.f32.gmra.mxu0 %v998
      %v1000 = vpop.f32.mrf.mxu0
      %v1001 = vadd.f32 %v887, %v1000
      %v1002 = vpop.f32.mrf.mxu0
      %1003 = vmatprep.mubr.f32.mxu0 0.0
      %v1004 = vand.u32 %v272, 4294901760
      %1005 = vmatmul.mubr.f32.gmra.mxu0 %v1004
      %v1006 = vpop.f32.mrf.mxu0
      %v1007 = vadd.f32 %v893, %v1006
      %v1008 = vpop.f32.mrf.mxu0
      %1009 = vmatprep.mubr.f32.mxu0 0.0
      %v1010 = vand.u32 %v275, 4294901760
      %1011 = vmatmul.mubr.f32.gmra.mxu0 %v1010
      %v1012 = vpop.f32.mrf.mxu0
      %v1013 = vadd.f32 %v899, %v1012
      %v1014 = vpop.f32.mrf.mxu0
      %1015 = vmatprep.mubr.f32.mxu0 0.0
      %v1016 = vand.u32 %v278, 4294901760
      %1017 = vmatmul.mubr.f32.gmra.mxu0 %v1016
      %v1018 = vpop.f32.mrf.mxu0
      %v1019 = vadd.f32 %v905, %v1018
      %v1020 = vpop.f32.mrf.mxu0
      %1021 = vmatprep.mubr.f32.mxu0 0.0
      %v1022 = vand.u32 %v281, 4294901760
      %1023 = vmatmul.mubr.f32.gmra.mxu0 %v1022
      %v1024 = vpop.f32.mrf.mxu0
      %v1025 = vadd.f32 %v911, %v1024
      %v1026 = vpop.f32.mrf.mxu0
      %1027 = vmatprep.mubr.f32.mxu0 0.0
      %v1028 = vand.u32 %v284, 4294901760
      %1029 = vmatmul.mubr.f32.gmra.mxu0 %v1028
      %v1030 = vpop.f32.mrf.mxu0
      %v1031 = vadd.f32 %v917, %v1030
      %v1032 = vpop.f32.mrf.mxu0
      %1033 = vmatprep.mubr.f32.mxu0 0.0
      %v1034 = vand.u32 %v287, 4294901760
      %1035 = vmatmul.mubr.f32.gmra.mxu0 %v1034
      %v1036 = vpop.f32.mrf.mxu0
      %v1037 = vadd.f32 %v923, %v1036
      %v1038 = vpop.f32.mrf.mxu0
      %1039 = vdwg.mxu0
      %v1040 = vld [vmem:[%s2] sm:$0x1]
      %v1042 = vlaneseq
      %v1043 = vshrl.u32 %v1042, 7
      %v1044 = vsub.s32 0, %v1043
      %v1045 = vrot.slane %v1040, %v1044
      %v1047 = vadd.f32 %v995, %v1045
      %v1048 = vadd.f32 %v1001, %v1045
      %v1049 = vadd.f32 %v1007, %v1045
      %v1050 = vadd.f32 %v1013, %v1045
      %v1051 = vadd.f32 %v1019, %v1045
      %v1052 = vadd.f32 %v1025, %v1045
      %v1053 = vadd.f32 %v1031, %v1045
      %v1054 = vadd.f32 %v1037, %v1045
      %v1055 = vmax.f32 %v1047, 0.0
      %v1056 = vmax.f32 %v1048, 0.0
      %v1057 = vmax.f32 %v1049, 0.0
      %v1058 = vmax.f32 %v1050, 0.0
      %v1059 = vmax.f32 %v1051, 0.0
      %v1060 = vmax.f32 %v1052, 0.0
      %v1061 = vmax.f32 %v1053, 0.0
      %v1062 = vmax.f32 %v1054, 0.0
      %v1063 = vld [vmem:[%s3] sm:$0xff]
      %v1064 = vld [vmem:[%s3 + $0x8] sm:$0xff]
      %v1065 = vld [vmem:[%s3 + $0x10] sm:$0xff]
      %v1066 = vld [vmem:[%s3 + $0x18] sm:$0xff]
      %v1067 = vld [vmem:[%s3 + $0x20] sm:$0xff]
      %v1068 = vld [vmem:[%s3 + $0x28] sm:$0xff]
      %v1069 = vld [vmem:[%s3 + $0x30] sm:$0xff]
      %v1070 = vld [vmem:[%s3 + $0x38] sm:$0xff]
      %v1071 = vld [vmem:[%s4] sm:$0x1]
      %v1073 = vlaneseq
      %v1074 = vshrl.u32 %v1073, 7
      %v1075 = vsub.s32 0, %v1074
      %v1076 = vrot.slane %v1071, %v1075
      %vm1078 = vcmask 523264
      %v1080 = vsel %vm1078, %v1055, 0
      %v1083 = vsel %vm1078, %v1056, 0
      %v1086 = vsel %vm1078, %v1057, 0
      %v1089 = vsel %vm1078, %v1058, 0
      %v1092 = vsel %vm1078, %v1059, 0
      %v1095 = vsel %vm1078, %v1060, 0
      %v1098 = vsel %vm1078, %v1061, 0
      %v1101 = vsel %vm1078, %v1062, 0
      %1103 = vmatprep.subr.mxu0 0.0
      %1104 = vmatpush1.msra.mxu0 0.0
      %1105 = vmatprep.subr.mxu0 0.0
      %1106 = vmatpush1.msra.mxu0 0.0
      %1107 = vmatprep.subr.mxu0 0.0
      %1108 = vmatpush1.msra.mxu0 0.0
      %1109 = vmatprep.subr.mxu0 0.0
      %1110 = vmatpush1.msra.mxu0 0.0
      %1111 = vmatprep.subr.mxu0 0.0
      %1112 = vmatpush1.msra.mxu0 0.0
      %1113 = vmatprep.subr.mxu0 0.0
      %1114 = vmatpush1.msra.mxu0 0.0
      %1115 = vmatprep.subr.mxu0 0.0
      %1116 = vmatpush1.msra.mxu0 0.0
      %1117 = vmatprep.subr.mxu0 0.0
      %1118 = vmatpush1.msra.mxu0 0.0
      %1119 = vmatprep.subr.mxu0 0.0
      %v1120 = vand.u32 %v1070, 4294901760
      %1121 = vmatpush1.msra.mxu0 %v1120
      %1122 = vmatprep.subr.mxu0 0.0
      %v1123 = vand.u32 %v1069, 4294901760
      %1124 = vmatpush1.msra.mxu0 %v1123
      %1125 = vmatprep.subr.mxu0 0.0
      %v1126 = vand.u32 %v1068, 4294901760
      %1127 = vmatpush1.msra.mxu0 %v1126
      %1128 = vmatprep.subr.mxu0 0.0
      %v1129 = vand.u32 %v1067, 4294901760
      %1130 = vmatpush1.msra.mxu0 %v1129
      %1131 = vmatprep.subr.mxu0 0.0
      %v1132 = vand.u32 %v1066, 4294901760
      %1133 = vmatpush1.msra.mxu0 %v1132
      %1134 = vmatprep.subr.mxu0 0.0
      %v1135 = vand.u32 %v1065, 4294901760
      %1136 = vmatpush1.msra.mxu0 %v1135
      %1137 = vmatprep.subr.mxu0 0.0
      %v1138 = vand.u32 %v1064, 4294901760
      %1139 = vmatpush1.msra.mxu0 %v1138
      %1140 = vmatprep.subr.mxu0 0.0
      %v1141 = vand.u32 %v1063, 4294901760
      %1142 = vmatpush1.msra.mxu0 %v1141
      %1143 = vmatprep.subr.mxu0 0.0
      %1144 = vmatpush2.msra.mxu0 0.0
      %1145 = vmatprep.subr.mxu0 0.0
      %1146 = vmatpush2.msra.mxu0 0.0
      %1147 = vmatprep.subr.mxu0 0.0
      %1148 = vmatpush2.msra.mxu0 0.0
      %1149 = vmatprep.subr.mxu0 0.0
      %1150 = vmatpush2.msra.mxu0 0.0
      %1151 = vmatprep.subr.mxu0 0.0
      %1152 = vmatpush2.msra.mxu0 0.0
      %1153 = vmatprep.subr.mxu0 0.0
      %1154 = vmatpush2.msra.mxu0 0.0
      %1155 = vmatprep.subr.mxu0 0.0
      %1156 = vmatpush2.msra.mxu0 0.0
      %1157 = vmatprep.subr.mxu0 0.0
      %1158 = vmatpush2.msra.mxu0 0.0
      %1159 = vmatprep.subr.mxu0 0.0
      %1160 = vmatpush2.msra.mxu0 0.0
      %1161 = vmatprep.subr.mxu0 0.0
      %1162 = vmatpush2.msra.mxu0 0.0
      %1163 = vmatprep.subr.mxu0 0.0
      %1164 = vmatpush2.msra.mxu0 0.0
      %1165 = vmatprep.subr.mxu0 0.0
      %1166 = vmatpush2.msra.mxu0 0.0
      %1167 = vmatprep.subr.mxu0 0.0
      %1168 = vmatpush2.msra.mxu0 0.0
      %1169 = vmatprep.subr.mxu0 0.0
      %1170 = vmatpush2.msra.mxu0 0.0
      %1171 = vmatprep.subr.mxu0 0.0
      %1172 = vmatpush2.msra.mxu0 0.0
      %1173 = vmatprep.subr.mxu0 0.0
      %1174 = vmatpush2.msra.mxu0 0.0
      %1175 = vmatprep.mubr.f32.mxu0 0.0
      %v1176 = vand.u32 %v1080, 4294901760
      %v1177 = vsub.f32 %v1080, %v1176
      %v1178 = vand.u32 %v1177, 4294901760
      %v1179 = vsub.f32 %v1177, %v1178
      %v1180 = vand.u32 %v1179, 4294901760
      %1181 = vmatmul.mubr.f32.gmra.mxu0 %v1180
      %v1182 = vpop.f32.mrf.mxu0
      %v1183 = vadd.f32 %v1076, %v1182
      %v1184 = vpop.f32.mrf.mxu0
      %1185 = vmatprep.mubr.f32.mxu0 0.0
      %v1186 = vand.u32 %v1083, 4294901760
      %v1187 = vsub.f32 %v1083, %v1186
      %v1188 = vand.u32 %v1187, 4294901760
      %v1189 = vsub.f32 %v1187, %v1188
      %v1190 = vand.u32 %v1189, 4294901760
      %1191 = vmatmul.mubr.f32.gmra.mxu0 %v1190
      %v1192 = vpop.f32.mrf.mxu0
      %v1193 = vadd.f32 %v1076, %v1192
      %v1194 = vpop.f32.mrf.mxu0
      %1195 = vmatprep.mubr.f32.mxu0 0.0
      %v1196 = vand.u32 %v1086, 4294901760
      %v1197 = vsub.f32 %v1086, %v1196
      %v1198 = vand.u32 %v1197, 4294901760
      %v1199 = vsub.f32 %v1197, %v1198
      %v1200 = vand.u32 %v1199, 4294901760
      %1201 = vmatmul.mubr.f32.gmra.mxu0 %v1200
      %v1202 = vpop.f32.mrf.mxu0
      %v1203 = vadd.f32 %v1076, %v1202
      %v1204 = vpop.f32.mrf.mxu0
      %1205 = vmatprep.mubr.f32.mxu0 0.0
      %v1206 = vand.u32 %v1089, 4294901760
      %v1207 = vsub.f32 %v1089, %v1206
      %v1208 = vand.u32 %v1207, 4294901760
      %v1209 = vsub.f32 %v1207, %v1208
      %v1210 = vand.u32 %v1209, 4294901760
      %1211 = vmatmul.mubr.f32.gmra.mxu0 %v1210
      %v1212 = vpop.f32.mrf.mxu0
      %v1213 = vadd.f32 %v1076, %v1212
      %v1214 = vpop.f32.mrf.mxu0
      %1215 = vmatprep.mubr.f32.mxu0 0.0
      %v1216 = vand.u32 %v1092, 4294901760
      %v1217 = vsub.f32 %v1092, %v1216
      %v1218 = vand.u32 %v1217, 4294901760
      %v1219 = vsub.f32 %v1217, %v1218
      %v1220 = vand.u32 %v1219, 4294901760
      %1221 = vmatmul.mubr.f32.gmra.mxu0 %v1220
      %v1222 = vpop.f32.mrf.mxu0
      %v1223 = vadd.f32 %v1076, %v1222
      %v1224 = vpop.f32.mrf.mxu0
      %1225 = vmatprep.mubr.f32.mxu0 0.0
      %v1226 = vand.u32 %v1095, 4294901760
      %v1227 = vsub.f32 %v1095, %v1226
      %v1228 = vand.u32 %v1227, 4294901760
      %v1229 = vsub.f32 %v1227, %v1228
      %v1230 = vand.u32 %v1229, 4294901760
      %1231 = vmatmul.mubr.f32.gmra.mxu0 %v1230
      %v1232 = vpop.f32.mrf.mxu0
      %v1233 = vadd.f32 %v1076, %v1232
      %v1234 = vpop.f32.mrf.mxu0
      %1235 = vmatprep.mubr.f32.mxu0 0.0
      %v1236 = vand.u32 %v1098, 4294901760
      %v1237 = vsub.f32 %v1098, %v1236
      %v1238 = vand.u32 %v1237, 4294901760
      %v1239 = vsub.f32 %v1237, %v1238
      %v1240 = vand.u32 %v1239, 4294901760
      %1241 = vmatmul.mubr.f32.gmra.mxu0 %v1240
      %v1242 = vpop.f32.mrf.mxu0
      %v1243 = vadd.f32 %v1076, %v1242
      %v1244 = vpop.f32.mrf.mxu0
      %1245 = vmatprep.mubr.f32.mxu0 0.0
      %v1246 = vand.u32 %v1101, 4294901760
      %v1247 = vsub.f32 %v1101, %v1246
      %v1248 = vand.u32 %v1247, 4294901760
      %v1249 = vsub.f32 %v1247, %v1248
      %v1250 = vand.u32 %v1249, 4294901760
      %1251 = vmatmul.mubr.f32.gmra.mxu0 %v1250
      %v1252 = vpop.f32.mrf.mxu0
      %v1253 = vadd.f32 %v1076, %v1252
      %v1254 = vpop.f32.mrf.mxu0
      %1255 = vdwg.mxu0
      %1256 = vmatprep.subr.mxu0 0.0
      %1257 = vmatpush1.msra.mxu0 0.0
      %1258 = vmatprep.subr.mxu0 0.0
      %1259 = vmatpush1.msra.mxu0 0.0
      %1260 = vmatprep.subr.mxu0 0.0
      %1261 = vmatpush1.msra.mxu0 0.0
      %1262 = vmatprep.subr.mxu0 0.0
      %1263 = vmatpush1.msra.mxu0 0.0
      %1264 = vmatprep.subr.mxu0 0.0
      %1265 = vmatpush1.msra.mxu0 0.0
      %1266 = vmatprep.subr.mxu0 0.0
      %1267 = vmatpush1.msra.mxu0 0.0
      %1268 = vmatprep.subr.mxu0 0.0
      %1269 = vmatpush1.msra.mxu0 0.0
      %1270 = vmatprep.subr.mxu0 0.0
      %1271 = vmatpush1.msra.mxu0 0.0
      %1272 = vmatprep.subr.mxu0 0.0
      %v1273 = vand.u32 %v1070, 4294901760
      %v1274 = vsub.f32 %v1070, %v1273
      %v1275 = vand.u32 %v1274, 4294901760
      %v1276 = vsub.f32 %v1274, %v1275
      %v1277 = vand.u32 %v1276, 4294901760
      %1278 = vmatpush1.msra.mxu0 %v1277
      %1279 = vmatprep.subr.mxu0 0.0
      %v1280 = vand.u32 %v1069, 4294901760
      %v1281 = vsub.f32 %v1069, %v1280
      %v1282 = vand.u32 %v1281, 4294901760
      %v1283 = vsub.f32 %v1281, %v1282
      %v1284 = vand.u32 %v1283, 4294901760
      %1285 = vmatpush1.msra.mxu0 %v1284
      %1286 = vmatprep.subr.mxu0 0.0
      %v1287 = vand.u32 %v1068, 4294901760
      %v1288 = vsub.f32 %v1068, %v1287
      %v1289 = vand.u32 %v1288, 4294901760
      %v1290 = vsub.f32 %v1288, %v1289
      %v1291 = vand.u32 %v1290, 4294901760
      %1292 = vmatpush1.msra.mxu0 %v1291
      %1293 = vmatprep.subr.mxu0 0.0
      %v1294 = vand.u32 %v1067, 4294901760
      %v1295 = vsub.f32 %v1067, %v1294
      %v1296 = vand.u32 %v1295, 4294901760
      %v1297 = vsub.f32 %v1295, %v1296
      %v1298 = vand.u32 %v1297, 4294901760
      %1299 = vmatpush1.msra.mxu0 %v1298
      %1300 = vmatprep.subr.mxu0 0.0
      %v1301 = vand.u32 %v1066, 4294901760
      %v1302 = vsub.f32 %v1066, %v1301
      %v1303 = vand.u32 %v1302, 4294901760
      %v1304 = vsub.f32 %v1302, %v1303
      %v1305 = vand.u32 %v1304, 4294901760
      %1306 = vmatpush1.msra.mxu0 %v1305
      %1307 = vmatprep.subr.mxu0 0.0
      %v1308 = vand.u32 %v1065, 4294901760
      %v1309 = vsub.f32 %v1065, %v1308
      %v1310 = vand.u32 %v1309, 4294901760
      %v1311 = vsub.f32 %v1309, %v1310
      %v1312 = vand.u32 %v1311, 4294901760
      %1313 = vmatpush1.msra.mxu0 %v1312
      %1314 = vmatprep.subr.mxu0 0.0
      %v1315 = vand.u32 %v1064, 4294901760
      %v1316 = vsub.f32 %v1064, %v1315
      %v1317 = vand.u32 %v1316, 4294901760
      %v1318 = vsub.f32 %v1316, %v1317
      %v1319 = vand.u32 %v1318, 4294901760
      %1320 = vmatpush1.msra.mxu0 %v1319
      %1321 = vmatprep.subr.mxu0 0.0
      %v1322 = vand.u32 %v1063, 4294901760
      %v1323 = vsub.f32 %v1063, %v1322
      %v1324 = vand.u32 %v1323, 4294901760
      %v1325 = vsub.f32 %v1323, %v1324
      %v1326 = vand.u32 %v1325, 4294901760
      %1327 = vmatpush1.msra.mxu0 %v1326
      %1328 = vmatprep.subr.mxu0 0.0
      %1329 = vmatpush2.msra.mxu0 0.0
      %1330 = vmatprep.subr.mxu0 0.0
      %1331 = vmatpush2.msra.mxu0 0.0
      %1332 = vmatprep.subr.mxu0 0.0
      %1333 = vmatpush2.msra.mxu0 0.0
      %1334 = vmatprep.subr.mxu0 0.0
      %1335 = vmatpush2.msra.mxu0 0.0
      %1336 = vmatprep.subr.mxu0 0.0
      %1337 = vmatpush2.msra.mxu0 0.0
      %1338 = vmatprep.subr.mxu0 0.0
      %1339 = vmatpush2.msra.mxu0 0.0
      %1340 = vmatprep.subr.mxu0 0.0
      %1341 = vmatpush2.msra.mxu0 0.0
      %1342 = vmatprep.subr.mxu0 0.0
      %1343 = vmatpush2.msra.mxu0 0.0
      %1344 = vmatprep.subr.mxu0 0.0
      %1345 = vmatpush2.msra.mxu0 0.0
      %1346 = vmatprep.subr.mxu0 0.0
      %1347 = vmatpush2.msra.mxu0 0.0
      %1348 = vmatprep.subr.mxu0 0.0
      %1349 = vmatpush2.msra.mxu0 0.0
      %1350 = vmatprep.subr.mxu0 0.0
      %1351 = vmatpush2.msra.mxu0 0.0
      %1352 = vmatprep.subr.mxu0 0.0
      %1353 = vmatpush2.msra.mxu0 0.0
      %1354 = vmatprep.subr.mxu0 0.0
      %1355 = vmatpush2.msra.mxu0 0.0
      %1356 = vmatprep.subr.mxu0 0.0
      %1357 = vmatpush2.msra.mxu0 0.0
      %1358 = vmatprep.subr.mxu0 0.0
      %1359 = vmatpush2.msra.mxu0 0.0
      %1360 = vmatprep.mubr.f32.mxu0 0.0
      %v1361 = vand.u32 %v1080, 4294901760
      %1362 = vmatmul.mubr.f32.gmra.mxu0 %v1361
      %v1363 = vpop.f32.mrf.mxu0
      %v1364 = vadd.f32 %v1183, %v1363
      %v1365 = vpop.f32.mrf.mxu0
      %1366 = vmatprep.mubr.f32.mxu0 0.0
      %v1367 = vand.u32 %v1083, 4294901760
      %1368 = vmatmul.mubr.f32.gmra.mxu0 %v1367
      %v1369 = vpop.f32.mrf.mxu0
      %v1370 = vadd.f32 %v1193, %v1369
      %v1371 = vpop.f32.mrf.mxu0
      %1372 = vmatprep.mubr.f32.mxu0 0.0
      %v1373 = vand.u32 %v1086, 4294901760
      %1374 = vmatmul.mubr.f32.gmra.mxu0 %v1373
      %v1375 = vpop.f32.mrf.mxu0
      %v1376 = vadd.f32 %v1203, %v1375
      %v1377 = vpop.f32.mrf.mxu0
      %1378 = vmatprep.mubr.f32.mxu0 0.0
      %v1379 = vand.u32 %v1089, 4294901760
      %1380 = vmatmul.mubr.f32.gmra.mxu0 %v1379
      %v1381 = vpop.f32.mrf.mxu0
      %v1382 = vadd.f32 %v1213, %v1381
      %v1383 = vpop.f32.mrf.mxu0
      %1384 = vmatprep.mubr.f32.mxu0 0.0
      %v1385 = vand.u32 %v1092, 4294901760
      %1386 = vmatmul.mubr.f32.gmra.mxu0 %v1385
      %v1387 = vpop.f32.mrf.mxu0
      %v1388 = vadd.f32 %v1223, %v1387
      %v1389 = vpop.f32.mrf.mxu0
      %1390 = vmatprep.mubr.f32.mxu0 0.0
      %v1391 = vand.u32 %v1095, 4294901760
      %1392 = vmatmul.mubr.f32.gmra.mxu0 %v1391
      %v1393 = vpop.f32.mrf.mxu0
      %v1394 = vadd.f32 %v1233, %v1393
      %v1395 = vpop.f32.mrf.mxu0
      %1396 = vmatprep.mubr.f32.mxu0 0.0
      %v1397 = vand.u32 %v1098, 4294901760
      %1398 = vmatmul.mubr.f32.gmra.mxu0 %v1397
      %v1399 = vpop.f32.mrf.mxu0
      %v1400 = vadd.f32 %v1243, %v1399
      %v1401 = vpop.f32.mrf.mxu0
      %1402 = vmatprep.mubr.f32.mxu0 0.0
      %v1403 = vand.u32 %v1101, 4294901760
      %1404 = vmatmul.mubr.f32.gmra.mxu0 %v1403
      %v1405 = vpop.f32.mrf.mxu0
      %v1406 = vadd.f32 %v1253, %v1405
      %v1407 = vpop.f32.mrf.mxu0
      %1408 = vdwg.mxu0
      %1409 = vmatprep.subr.mxu0 0.0
      %1410 = vmatpush1.msra.mxu0 0.0
      %1411 = vmatprep.subr.mxu0 0.0
      %1412 = vmatpush1.msra.mxu0 0.0
      %1413 = vmatprep.subr.mxu0 0.0
      %1414 = vmatpush1.msra.mxu0 0.0
      %1415 = vmatprep.subr.mxu0 0.0
      %1416 = vmatpush1.msra.mxu0 0.0
      %1417 = vmatprep.subr.mxu0 0.0
      %1418 = vmatpush1.msra.mxu0 0.0
      %1419 = vmatprep.subr.mxu0 0.0
      %1420 = vmatpush1.msra.mxu0 0.0
      %1421 = vmatprep.subr.mxu0 0.0
      %1422 = vmatpush1.msra.mxu0 0.0
      %1423 = vmatprep.subr.mxu0 0.0
      %1424 = vmatpush1.msra.mxu0 0.0
      %1425 = vmatprep.subr.mxu0 0.0
      %v1426 = vand.u32 %v1070, 4294901760
      %v1427 = vsub.f32 %v1070, %v1426
      %1428 = vmatpush1.msra.mxu0 %v1427
      %1429 = vmatprep.subr.mxu0 0.0
      %v1430 = vand.u32 %v1069, 4294901760
      %v1431 = vsub.f32 %v1069, %v1430
      %1432 = vmatpush1.msra.mxu0 %v1431
      %1433 = vmatprep.subr.mxu0 0.0
      %v1434 = vand.u32 %v1068, 4294901760
      %v1435 = vsub.f32 %v1068, %v1434
      %1436 = vmatpush1.msra.mxu0 %v1435
      %1437 = vmatprep.subr.mxu0 0.0
      %v1438 = vand.u32 %v1067, 4294901760
      %v1439 = vsub.f32 %v1067, %v1438
      %1440 = vmatpush1.msra.mxu0 %v1439
      %1441 = vmatprep.subr.mxu0 0.0
      %v1442 = vand.u32 %v1066, 4294901760
      %v1443 = vsub.f32 %v1066, %v1442
      %1444 = vmatpush1.msra.mxu0 %v1443
      %1445 = vmatprep.subr.mxu0 0.0
      %v1446 = vand.u32 %v1065, 4294901760
      %v1447 = vsub.f32 %v1065, %v1446
      %1448 = vmatpush1.msra.mxu0 %v1447
      %1449 = vmatprep.subr.mxu0 0.0
      %v1450 = vand.u32 %v1064, 4294901760
      %v1451 = vsub.f32 %v1064, %v1450
      %1452 = vmatpush1.msra.mxu0 %v1451
      %1453 = vmatprep.subr.mxu0 0.0
      %v1454 = vand.u32 %v1063, 4294901760
      %v1455 = vsub.f32 %v1063, %v1454
      %1456 = vmatpush1.msra.mxu0 %v1455
      %1457 = vmatprep.subr.mxu0 0.0
      %1458 = vmatpush2.msra.mxu0 0.0
      %1459 = vmatprep.subr.mxu0 0.0
      %1460 = vmatpush2.msra.mxu0 0.0
      %1461 = vmatprep.subr.mxu0 0.0
      %1462 = vmatpush2.msra.mxu0 0.0
      %1463 = vmatprep.subr.mxu0 0.0
      %1464 = vmatpush2.msra.mxu0 0.0
      %1465 = vmatprep.subr.mxu0 0.0
      %1466 = vmatpush2.msra.mxu0 0.0
      %1467 = vmatprep.subr.mxu0 0.0
      %1468 = vmatpush2.msra.mxu0 0.0
      %1469 = vmatprep.subr.mxu0 0.0
      %1470 = vmatpush2.msra.mxu0 0.0
      %1471 = vmatprep.subr.mxu0 0.0
      %1472 = vmatpush2.msra.mxu0 0.0
      %1473 = vmatprep.subr.mxu0 0.0
      %1474 = vmatpush2.msra.mxu0 0.0
      %1475 = vmatprep.subr.mxu0 0.0
      %1476 = vmatpush2.msra.mxu0 0.0
      %1477 = vmatprep.subr.mxu0 0.0
      %1478 = vmatpush2.msra.mxu0 0.0
      %1479 = vmatprep.subr.mxu0 0.0
      %1480 = vmatpush2.msra.mxu0 0.0
      %1481 = vmatprep.subr.mxu0 0.0
      %1482 = vmatpush2.msra.mxu0 0.0
      %1483 = vmatprep.subr.mxu0 0.0
      %1484 = vmatpush2.msra.mxu0 0.0
      %1485 = vmatprep.subr.mxu0 0.0
      %1486 = vmatpush2.msra.mxu0 0.0
      %1487 = vmatprep.subr.mxu0 0.0
      %1488 = vmatpush2.msra.mxu0 0.0
      %1489 = vmatprep.mubr.f32.mxu0 0.0
      %v1490 = vand.u32 %v1080, 4294901760
      %v1491 = vsub.f32 %v1080, %v1490
      %1492 = vmatmul.mubr.f32.gmra.mxu0 %v1491
      %v1493 = vpop.f32.mrf.mxu0
      %v1494 = vadd.f32 %v1364, %v1493
      %v1495 = vpop.f32.mrf.mxu0
      %1496 = vmatprep.mubr.f32.mxu0 0.0
      %v1497 = vand.u32 %v1083, 4294901760
      %v1498 = vsub.f32 %v1083, %v1497
      %1499 = vmatmul.mubr.f32.gmra.mxu0 %v1498
      %v1500 = vpop.f32.mrf.mxu0
      %v1501 = vadd.f32 %v1370, %v1500
      %v1502 = vpop.f32.mrf.mxu0
      %1503 = vmatprep.mubr.f32.mxu0 0.0
      %v1504 = vand.u32 %v1086, 4294901760
      %v1505 = vsub.f32 %v1086, %v1504
      %1506 = vmatmul.mubr.f32.gmra.mxu0 %v1505
      %v1507 = vpop.f32.mrf.mxu0
      %v1508 = vadd.f32 %v1376, %v1507
      %v1509 = vpop.f32.mrf.mxu0
      %1510 = vmatprep.mubr.f32.mxu0 0.0
      %v1511 = vand.u32 %v1089, 4294901760
      %v1512 = vsub.f32 %v1089, %v1511
      %1513 = vmatmul.mubr.f32.gmra.mxu0 %v1512
      %v1514 = vpop.f32.mrf.mxu0
      %v1515 = vadd.f32 %v1382, %v1514
      %v1516 = vpop.f32.mrf.mxu0
      %1517 = vmatprep.mubr.f32.mxu0 0.0
      %v1518 = vand.u32 %v1092, 4294901760
      %v1519 = vsub.f32 %v1092, %v1518
      %1520 = vmatmul.mubr.f32.gmra.mxu0 %v1519
      %v1521 = vpop.f32.mrf.mxu0
      %v1522 = vadd.f32 %v1388, %v1521
      %v1523 = vpop.f32.mrf.mxu0
      %1524 = vmatprep.mubr.f32.mxu0 0.0
      %v1525 = vand.u32 %v1095, 4294901760
      %v1526 = vsub.f32 %v1095, %v1525
      %1527 = vmatmul.mubr.f32.gmra.mxu0 %v1526
      %v1528 = vpop.f32.mrf.mxu0
      %v1529 = vadd.f32 %v1394, %v1528
      %v1530 = vpop.f32.mrf.mxu0
      %1531 = vmatprep.mubr.f32.mxu0 0.0
      %v1532 = vand.u32 %v1098, 4294901760
      %v1533 = vsub.f32 %v1098, %v1532
      %1534 = vmatmul.mubr.f32.gmra.mxu0 %v1533
      %v1535 = vpop.f32.mrf.mxu0
      %v1536 = vadd.f32 %v1400, %v1535
      %v1537 = vpop.f32.mrf.mxu0
      %1538 = vmatprep.mubr.f32.mxu0 0.0
      %v1539 = vand.u32 %v1101, 4294901760
      %v1540 = vsub.f32 %v1101, %v1539
      %1541 = vmatmul.mubr.f32.gmra.mxu0 %v1540
      %v1542 = vpop.f32.mrf.mxu0
      %v1543 = vadd.f32 %v1406, %v1542
      %v1544 = vpop.f32.mrf.mxu0
      %1545 = vdwg.mxu0
      %1546 = vmatprep.subr.mxu0 0.0
      %1547 = vmatpush1.msra.mxu0 0.0
      %1548 = vmatprep.subr.mxu0 0.0
      %1549 = vmatpush1.msra.mxu0 0.0
      %1550 = vmatprep.subr.mxu0 0.0
      %1551 = vmatpush1.msra.mxu0 0.0
      %1552 = vmatprep.subr.mxu0 0.0
      %1553 = vmatpush1.msra.mxu0 0.0
      %1554 = vmatprep.subr.mxu0 0.0
      %1555 = vmatpush1.msra.mxu0 0.0
      %1556 = vmatprep.subr.mxu0 0.0
      %1557 = vmatpush1.msra.mxu0 0.0
      %1558 = vmatprep.subr.mxu0 0.0
      %1559 = vmatpush1.msra.mxu0 0.0
      %1560 = vmatprep.subr.mxu0 0.0
      %1561 = vmatpush1.msra.mxu0 0.0
      %1562 = vmatprep.subr.mxu0 0.0
      %v1563 = vand.u32 %v1070, 4294901760
      %1564 = vmatpush1.msra.mxu0 %v1563
      %1565 = vmatprep.subr.mxu0 0.0
      %v1566 = vand.u32 %v1069, 4294901760
      %1567 = vmatpush1.msra.mxu0 %v1566
      %1568 = vmatprep.subr.mxu0 0.0
      %v1569 = vand.u32 %v1068, 4294901760
      %1570 = vmatpush1.msra.mxu0 %v1569
      %1571 = vmatprep.subr.mxu0 0.0
      %v1572 = vand.u32 %v1067, 4294901760
      %1573 = vmatpush1.msra.mxu0 %v1572
      %1574 = vmatprep.subr.mxu0 0.0
      %v1575 = vand.u32 %v1066, 4294901760
      %1576 = vmatpush1.msra.mxu0 %v1575
      %1577 = vmatprep.subr.mxu0 0.0
      %v1578 = vand.u32 %v1065, 4294901760
      %1579 = vmatpush1.msra.mxu0 %v1578
      %1580 = vmatprep.subr.mxu0 0.0
      %v1581 = vand.u32 %v1064, 4294901760
      %1582 = vmatpush1.msra.mxu0 %v1581
      %1583 = vmatprep.subr.mxu0 0.0
      %v1584 = vand.u32 %v1063, 4294901760
      %1585 = vmatpush1.msra.mxu0 %v1584
      %1586 = vmatprep.subr.mxu0 0.0
      %1587 = vmatpush2.msra.mxu0 0.0
      %1588 = vmatprep.subr.mxu0 0.0
      %1589 = vmatpush2.msra.mxu0 0.0
      %1590 = vmatprep.subr.mxu0 0.0
      %1591 = vmatpush2.msra.mxu0 0.0
      %1592 = vmatprep.subr.mxu0 0.0
      %1593 = vmatpush2.msra.mxu0 0.0
      %1594 = vmatprep.subr.mxu0 0.0
      %1595 = vmatpush2.msra.mxu0 0.0
      %1596 = vmatprep.subr.mxu0 0.0
      %1597 = vmatpush2.msra.mxu0 0.0
      %1598 = vmatprep.subr.mxu0 0.0
      %1599 = vmatpush2.msra.mxu0 0.0
      %1600 = vmatprep.subr.mxu0 0.0
      %1601 = vmatpush2.msra.mxu0 0.0
      %1602 = vmatprep.subr.mxu0 0.0
      %1603 = vmatpush2.msra.mxu0 0.0
      %1604 = vmatprep.subr.mxu0 0.0
      %1605 = vmatpush2.msra.mxu0 0.0
      %1606 = vmatprep.subr.mxu0 0.0
      %1607 = vmatpush2.msra.mxu0 0.0
      %1608 = vmatprep.subr.mxu0 0.0
      %1609 = vmatpush2.msra.mxu0 0.0
      %1610 = vmatprep.subr.mxu0 0.0
      %1611 = vmatpush2.msra.mxu0 0.0
      %1612 = vmatprep.subr.mxu0 0.0
      %1613 = vmatpush2.msra.mxu0 0.0
      %1614 = vmatprep.subr.mxu0 0.0
      %1615 = vmatpush2.msra.mxu0 0.0
      %1616 = vmatprep.subr.mxu0 0.0
      %1617 = vmatpush2.msra.mxu0 0.0
      %1618 = vmatprep.mubr.f32.mxu0 0.0
      %v1619 = vand.u32 %v1080, 4294901760
      %v1620 = vsub.f32 %v1080, %v1619
      %v1621 = vand.u32 %v1620, 4294901760
      %1622 = vmatmul.mubr.f32.gmra.mxu0 %v1621
      %v1623 = vpop.f32.mrf.mxu0
      %v1624 = vadd.f32 %v1494, %v1623
      %v1625 = vpop.f32.mrf.mxu0
      %1626 = vmatprep.mubr.f32.mxu0 0.0
      %v1627 = vand.u32 %v1083, 4294901760
      %v1628 = vsub.f32 %v1083, %v1627
      %v1629 = vand.u32 %v1628, 4294901760
      %1630 = vmatmul.mubr.f32.gmra.mxu0 %v1629
      %v1631 = vpop.f32.mrf.mxu0
      %v1632 = vadd.f32 %v1501, %v1631
      %v1633 = vpop.f32.mrf.mxu0
      %1634 = vmatprep.mubr.f32.mxu0 0.0
      %v1635 = vand.u32 %v1086, 4294901760
      %v1636 = vsub.f32 %v1086, %v1635
      %v1637 = vand.u32 %v1636, 4294901760
      %1638 = vmatmul.mubr.f32.gmra.mxu0 %v1637
      %v1639 = vpop.f32.mrf.mxu0
      %v1640 = vadd.f32 %v1508, %v1639
      %v1641 = vpop.f32.mrf.mxu0
      %1642 = vmatprep.mubr.f32.mxu0 0.0
      %v1643 = vand.u32 %v1089, 4294901760
      %v1644 = vsub.f32 %v1089, %v1643
      %v1645 = vand.u32 %v1644, 4294901760
      %1646 = vmatmul.mubr.f32.gmra.mxu0 %v1645
      %v1647 = vpop.f32.mrf.mxu0
      %v1648 = vadd.f32 %v1515, %v1647
      %v1649 = vpop.f32.mrf.mxu0
      %1650 = vmatprep.mubr.f32.mxu0 0.0
      %v1651 = vand.u32 %v1092, 4294901760
      %v1652 = vsub.f32 %v1092, %v1651
      %v1653 = vand.u32 %v1652, 4294901760
      %1654 = vmatmul.mubr.f32.gmra.mxu0 %v1653
      %v1655 = vpop.f32.mrf.mxu0
      %v1656 = vadd.f32 %v1522, %v1655
      %v1657 = vpop.f32.mrf.mxu0
      %1658 = vmatprep.mubr.f32.mxu0 0.0
      %v1659 = vand.u32 %v1095, 4294901760
      %v1660 = vsub.f32 %v1095, %v1659
      %v1661 = vand.u32 %v1660, 4294901760
      %1662 = vmatmul.mubr.f32.gmra.mxu0 %v1661
      %v1663 = vpop.f32.mrf.mxu0
      %v1664 = vadd.f32 %v1529, %v1663
      %v1665 = vpop.f32.mrf.mxu0
      %1666 = vmatprep.mubr.f32.mxu0 0.0
      %v1667 = vand.u32 %v1098, 4294901760
      %v1668 = vsub.f32 %v1098, %v1667
      %v1669 = vand.u32 %v1668, 4294901760
      %1670 = vmatmul.mubr.f32.gmra.mxu0 %v1669
      %v1671 = vpop.f32.mrf.mxu0
      %v1672 = vadd.f32 %v1536, %v1671
      %v1673 = vpop.f32.mrf.mxu0
      %1674 = vmatprep.mubr.f32.mxu0 0.0
      %v1675 = vand.u32 %v1101, 4294901760
      %v1676 = vsub.f32 %v1101, %v1675
      %v1677 = vand.u32 %v1676, 4294901760
      %1678 = vmatmul.mubr.f32.gmra.mxu0 %v1677
      %v1679 = vpop.f32.mrf.mxu0
      %v1680 = vadd.f32 %v1543, %v1679
      %v1681 = vpop.f32.mrf.mxu0
      %1682 = vdwg.mxu0
      %1683 = vmatprep.subr.mxu0 0.0
      %1684 = vmatpush1.msra.mxu0 0.0
      %1685 = vmatprep.subr.mxu0 0.0
      %1686 = vmatpush1.msra.mxu0 0.0
      %1687 = vmatprep.subr.mxu0 0.0
      %1688 = vmatpush1.msra.mxu0 0.0
      %1689 = vmatprep.subr.mxu0 0.0
      %1690 = vmatpush1.msra.mxu0 0.0
      %1691 = vmatprep.subr.mxu0 0.0
      %1692 = vmatpush1.msra.mxu0 0.0
      %1693 = vmatprep.subr.mxu0 0.0
      %1694 = vmatpush1.msra.mxu0 0.0
      %1695 = vmatprep.subr.mxu0 0.0
      %1696 = vmatpush1.msra.mxu0 0.0
      %1697 = vmatprep.subr.mxu0 0.0
      %1698 = vmatpush1.msra.mxu0 0.0
      %1699 = vmatprep.subr.mxu0 0.0
      %v1700 = vand.u32 %v1070, 4294901760
      %v1701 = vsub.f32 %v1070, %v1700
      %v1702 = vand.u32 %v1701, 4294901760
      %1703 = vmatpush1.msra.mxu0 %v1702
      %1704 = vmatprep.subr.mxu0 0.0
      %v1705 = vand.u32 %v1069, 4294901760
      %v1706 = vsub.f32 %v1069, %v1705
      %v1707 = vand.u32 %v1706, 4294901760
      %1708 = vmatpush1.msra.mxu0 %v1707
      %1709 = vmatprep.subr.mxu0 0.0
      %v1710 = vand.u32 %v1068, 4294901760
      %v1711 = vsub.f32 %v1068, %v1710
      %v1712 = vand.u32 %v1711, 4294901760
      %1713 = vmatpush1.msra.mxu0 %v1712
      %1714 = vmatprep.subr.mxu0 0.0
      %v1715 = vand.u32 %v1067, 4294901760
      %v1716 = vsub.f32 %v1067, %v1715
      %v1717 = vand.u32 %v1716, 4294901760
      %1718 = vmatpush1.msra.mxu0 %v1717
      %1719 = vmatprep.subr.mxu0 0.0
      %v1720 = vand.u32 %v1066, 4294901760
      %v1721 = vsub.f32 %v1066, %v1720
      %v1722 = vand.u32 %v1721, 4294901760
      %1723 = vmatpush1.msra.mxu0 %v1722
      %1724 = vmatprep.subr.mxu0 0.0
      %v1725 = vand.u32 %v1065, 4294901760
      %v1726 = vsub.f32 %v1065, %v1725
      %v1727 = vand.u32 %v1726, 4294901760
      %1728 = vmatpush1.msra.mxu0 %v1727
      %1729 = vmatprep.subr.mxu0 0.0
      %v1730 = vand.u32 %v1064, 4294901760
      %v1731 = vsub.f32 %v1064, %v1730
      %v1732 = vand.u32 %v1731, 4294901760
      %1733 = vmatpush1.msra.mxu0 %v1732
      %1734 = vmatprep.subr.mxu0 0.0
      %v1735 = vand.u32 %v1063, 4294901760
      %v1736 = vsub.f32 %v1063, %v1735
      %v1737 = vand.u32 %v1736, 4294901760
      %1738 = vmatpush1.msra.mxu0 %v1737
      %1739 = vmatprep.subr.mxu0 0.0
      %1740 = vmatpush2.msra.mxu0 0.0
      %1741 = vmatprep.subr.mxu0 0.0
      %1742 = vmatpush2.msra.mxu0 0.0
      %1743 = vmatprep.subr.mxu0 0.0
      %1744 = vmatpush2.msra.mxu0 0.0
      %1745 = vmatprep.subr.mxu0 0.0
      %1746 = vmatpush2.msra.mxu0 0.0
      %1747 = vmatprep.subr.mxu0 0.0
      %1748 = vmatpush2.msra.mxu0 0.0
      %1749 = vmatprep.subr.mxu0 0.0
      %1750 = vmatpush2.msra.mxu0 0.0
      %1751 = vmatprep.subr.mxu0 0.0
      %1752 = vmatpush2.msra.mxu0 0.0
      %1753 = vmatprep.subr.mxu0 0.0
      %1754 = vmatpush2.msra.mxu0 0.0
      %1755 = vmatprep.subr.mxu0 0.0
      %1756 = vmatpush2.msra.mxu0 0.0
      %1757 = vmatprep.subr.mxu0 0.0
      %1758 = vmatpush2.msra.mxu0 0.0
      %1759 = vmatprep.subr.mxu0 0.0
      %1760 = vmatpush2.msra.mxu0 0.0
      %1761 = vmatprep.subr.mxu0 0.0
      %1762 = vmatpush2.msra.mxu0 0.0
      %1763 = vmatprep.subr.mxu0 0.0
      %1764 = vmatpush2.msra.mxu0 0.0
      %1765 = vmatprep.subr.mxu0 0.0
      %1766 = vmatpush2.msra.mxu0 0.0
      %1767 = vmatprep.subr.mxu0 0.0
      %1768 = vmatpush2.msra.mxu0 0.0
      %1769 = vmatprep.subr.mxu0 0.0
      %1770 = vmatpush2.msra.mxu0 0.0
      %1771 = vmatprep.mubr.f32.mxu0 0.0
      %v1772 = vand.u32 %v1080, 4294901760
      %1773 = vmatmul.mubr.f32.gmra.mxu0 %v1772
      %v1774 = vpop.f32.mrf.mxu0
      %v1775 = vadd.f32 %v1624, %v1774
      %v1776 = vpop.f32.mrf.mxu0
      %1777 = vmatprep.mubr.f32.mxu0 0.0
      %v1778 = vand.u32 %v1083, 4294901760
      %1779 = vmatmul.mubr.f32.gmra.mxu0 %v1778
      %v1780 = vpop.f32.mrf.mxu0
      %v1781 = vadd.f32 %v1632, %v1780
      %v1782 = vpop.f32.mrf.mxu0
      %1783 = vmatprep.mubr.f32.mxu0 0.0
      %v1784 = vand.u32 %v1086, 4294901760
      %1785 = vmatmul.mubr.f32.gmra.mxu0 %v1784
      %v1786 = vpop.f32.mrf.mxu0
      %v1787 = vadd.f32 %v1640, %v1786
      %v1788 = vpop.f32.mrf.mxu0
      %1789 = vmatprep.mubr.f32.mxu0 0.0
      %v1790 = vand.u32 %v1089, 4294901760
      %1791 = vmatmul.mubr.f32.gmra.mxu0 %v1790
      %v1792 = vpop.f32.mrf.mxu0
      %v1793 = vadd.f32 %v1648, %v1792
      %v1794 = vpop.f32.mrf.mxu0
      %1795 = vmatprep.mubr.f32.mxu0 0.0
      %v1796 = vand.u32 %v1092, 4294901760
      %1797 = vmatmul.mubr.f32.gmra.mxu0 %v1796
      %v1798 = vpop.f32.mrf.mxu0
      %v1799 = vadd.f32 %v1656, %v1798
      %v1800 = vpop.f32.mrf.mxu0
      %1801 = vmatprep.mubr.f32.mxu0 0.0
      %v1802 = vand.u32 %v1095, 4294901760
      %1803 = vmatmul.mubr.f32.gmra.mxu0 %v1802
      %v1804 = vpop.f32.mrf.mxu0
      %v1805 = vadd.f32 %v1664, %v1804
      %v1806 = vpop.f32.mrf.mxu0
      %1807 = vmatprep.mubr.f32.mxu0 0.0
      %v1808 = vand.u32 %v1098, 4294901760
      %1809 = vmatmul.mubr.f32.gmra.mxu0 %v1808
      %v1810 = vpop.f32.mrf.mxu0
      %v1811 = vadd.f32 %v1672, %v1810
      %v1812 = vpop.f32.mrf.mxu0
      %1813 = vmatprep.mubr.f32.mxu0 0.0
      %v1814 = vand.u32 %v1101, 4294901760
      %1815 = vmatmul.mubr.f32.gmra.mxu0 %v1814
      %v1816 = vpop.f32.mrf.mxu0
      %v1817 = vadd.f32 %v1680, %v1816
      %v1818 = vpop.f32.mrf.mxu0
      %1819 = vdwg.mxu0
      %1820 = vmatprep.subr.mxu0 0.0
      %1821 = vmatpush1.msra.mxu0 0.0
      %1822 = vmatprep.subr.mxu0 0.0
      %1823 = vmatpush1.msra.mxu0 0.0
      %1824 = vmatprep.subr.mxu0 0.0
      %1825 = vmatpush1.msra.mxu0 0.0
      %1826 = vmatprep.subr.mxu0 0.0
      %1827 = vmatpush1.msra.mxu0 0.0
      %1828 = vmatprep.subr.mxu0 0.0
      %1829 = vmatpush1.msra.mxu0 0.0
      %1830 = vmatprep.subr.mxu0 0.0
      %1831 = vmatpush1.msra.mxu0 0.0
      %1832 = vmatprep.subr.mxu0 0.0
      %1833 = vmatpush1.msra.mxu0 0.0
      %1834 = vmatprep.subr.mxu0 0.0
      %1835 = vmatpush1.msra.mxu0 0.0
      %1836 = vmatprep.subr.mxu0 0.0
      %v1837 = vand.u32 %v1070, 4294901760
      %1838 = vmatpush1.msra.mxu0 %v1837
      %1839 = vmatprep.subr.mxu0 0.0
      %v1840 = vand.u32 %v1069, 4294901760
      %1841 = vmatpush1.msra.mxu0 %v1840
      %1842 = vmatprep.subr.mxu0 0.0
      %v1843 = vand.u32 %v1068, 4294901760
      %1844 = vmatpush1.msra.mxu0 %v1843
      %1845 = vmatprep.subr.mxu0 0.0
      %v1846 = vand.u32 %v1067, 4294901760
      %1847 = vmatpush1.msra.mxu0 %v1846
      %1848 = vmatprep.subr.mxu0 0.0
      %v1849 = vand.u32 %v1066, 4294901760
      %1850 = vmatpush1.msra.mxu0 %v1849
      %1851 = vmatprep.subr.mxu0 0.0
      %v1852 = vand.u32 %v1065, 4294901760
      %1853 = vmatpush1.msra.mxu0 %v1852
      %1854 = vmatprep.subr.mxu0 0.0
      %v1855 = vand.u32 %v1064, 4294901760
      %1856 = vmatpush1.msra.mxu0 %v1855
      %1857 = vmatprep.subr.mxu0 0.0
      %v1858 = vand.u32 %v1063, 4294901760
      %1859 = vmatpush1.msra.mxu0 %v1858
      %1860 = vmatprep.subr.mxu0 0.0
      %1861 = vmatpush2.msra.mxu0 0.0
      %1862 = vmatprep.subr.mxu0 0.0
      %1863 = vmatpush2.msra.mxu0 0.0
      %1864 = vmatprep.subr.mxu0 0.0
      %1865 = vmatpush2.msra.mxu0 0.0
      %1866 = vmatprep.subr.mxu0 0.0
      %1867 = vmatpush2.msra.mxu0 0.0
      %1868 = vmatprep.subr.mxu0 0.0
      %1869 = vmatpush2.msra.mxu0 0.0
      %1870 = vmatprep.subr.mxu0 0.0
      %1871 = vmatpush2.msra.mxu0 0.0
      %1872 = vmatprep.subr.mxu0 0.0
      %1873 = vmatpush2.msra.mxu0 0.0
      %1874 = vmatprep.subr.mxu0 0.0
      %1875 = vmatpush2.msra.mxu0 0.0
      %1876 = vmatprep.subr.mxu0 0.0
      %1877 = vmatpush2.msra.mxu0 0.0
      %1878 = vmatprep.subr.mxu0 0.0
      %1879 = vmatpush2.msra.mxu0 0.0
      %1880 = vmatprep.subr.mxu0 0.0
      %1881 = vmatpush2.msra.mxu0 0.0
      %1882 = vmatprep.subr.mxu0 0.0
      %1883 = vmatpush2.msra.mxu0 0.0
      %1884 = vmatprep.subr.mxu0 0.0
      %1885 = vmatpush2.msra.mxu0 0.0
      %1886 = vmatprep.subr.mxu0 0.0
      %1887 = vmatpush2.msra.mxu0 0.0
      %1888 = vmatprep.subr.mxu0 0.0
      %1889 = vmatpush2.msra.mxu0 0.0
      %1890 = vmatprep.subr.mxu0 0.0
      %1891 = vmatpush2.msra.mxu0 0.0
      %1892 = vmatprep.mubr.f32.mxu0 0.0
      %v1893 = vand.u32 %v1080, 4294901760
      %1894 = vmatmul.mubr.f32.gmra.mxu0 %v1893
      %v1895 = vpop.f32.mrf.mxu0
      %v1896 = vadd.f32 %v1775, %v1895
      %v1897 = vpop.f32.mrf.mxu0
      %1898 = vmatprep.mubr.f32.mxu0 0.0
      %v1899 = vand.u32 %v1083, 4294901760
      %1900 = vmatmul.mubr.f32.gmra.mxu0 %v1899
      %v1901 = vpop.f32.mrf.mxu0
      %v1902 = vadd.f32 %v1781, %v1901
      %v1903 = vpop.f32.mrf.mxu0
      %1904 = vmatprep.mubr.f32.mxu0 0.0
      %v1905 = vand.u32 %v1086, 4294901760
      %1906 = vmatmul.mubr.f32.gmra.mxu0 %v1905
      %v1907 = vpop.f32.mrf.mxu0
      %v1908 = vadd.f32 %v1787, %v1907
      %v1909 = vpop.f32.mrf.mxu0
      %1910 = vmatprep.mubr.f32.mxu0 0.0
      %v1911 = vand.u32 %v1089, 4294901760
      %1912 = vmatmul.mubr.f32.gmra.mxu0 %v1911
      %v1913 = vpop.f32.mrf.mxu0
      %v1914 = vadd.f32 %v1793, %v1913
      %v1915 = vpop.f32.mrf.mxu0
      %1916 = vmatprep.mubr.f32.mxu0 0.0
      %v1917 = vand.u32 %v1092, 4294901760
      %1918 = vmatmul.mubr.f32.gmra.mxu0 %v1917
      %v1919 = vpop.f32.mrf.mxu0
      %v1920 = vadd.f32 %v1799, %v1919
      %v1921 = vpop.f32.mrf.mxu0
      %1922 = vmatprep.mubr.f32.mxu0 0.0
      %v1923 = vand.u32 %v1095, 4294901760
      %1924 = vmatmul.mubr.f32.gmra.mxu0 %v1923
      %v1925 = vpop.f32.mrf.mxu0
      %v1926 = vadd.f32 %v1805, %v1925
      %v1927 = vpop.f32.mrf.mxu0
      %1928 = vmatprep.mubr.f32.mxu0 0.0
      %v1929 = vand.u32 %v1098, 4294901760
      %1930 = vmatmul.mubr.f32.gmra.mxu0 %v1929
      %v1931 = vpop.f32.mrf.mxu0
      %v1932 = vadd.f32 %v1811, %v1931
      %v1933 = vpop.f32.mrf.mxu0
      %1934 = vmatprep.mubr.f32.mxu0 0.0
      %v1935 = vand.u32 %v1101, 4294901760
      %1936 = vmatmul.mubr.f32.gmra.mxu0 %v1935
      %v1937 = vpop.f32.mrf.mxu0
      %v1938 = vadd.f32 %v1817, %v1937
      %v1939 = vpop.f32.mrf.mxu0
      %1940 = vdwg.mxu0
      %1949 = vrot.lane.b32.xlu0 %v995, 64
      %v1950 = vpop.permute.xlu0 %1949
      %1951 = vrot.lane.b32.xlu0 %v1001, 64
      %v1952 = vpop.permute.xlu0 %1951
      %1953 = vrot.lane.b32.xlu0 %v1007, 64
      %v1954 = vpop.permute.xlu0 %1953
      %1955 = vrot.lane.b32.xlu0 %v1013, 64
      %v1956 = vpop.permute.xlu0 %1955
      %1957 = vrot.lane.b32.xlu0 %v1019, 64
      %v1958 = vpop.permute.xlu0 %1957
      %1959 = vrot.lane.b32.xlu0 %v1025, 64
      %v1960 = vpop.permute.xlu0 %1959
      %1961 = vrot.lane.b32.xlu0 %v1031, 64
      %v1962 = vpop.permute.xlu0 %1961
      %1963 = vrot.lane.b32.xlu0 %v1037, 64
      %v1964 = vpop.permute.xlu0 %1963
      %v1973 = vmul.f32 %v1896, %v1950
      %v1974 = vmul.f32 %v1902, %v1952
      %v1975 = vmul.f32 %v1908, %v1954
      %v1976 = vmul.f32 %v1914, %v1956
      %v1977 = vmul.f32 %v1920, %v1958
      %v1978 = vmul.f32 %v1926, %v1960
      %v1979 = vmul.f32 %v1932, %v1962
      %v1980 = vmul.f32 %v1938, %v1964
      %v1981 = vld [vmem:[%s5] sm:$0xff]
      %v1982 = vld [vmem:[%s5 + $0x8] sm:$0xff]
      %v1983 = vld [vmem:[%s5 + $0x10] sm:$0xff]
      %v1984 = vld [vmem:[%s5 + $0x18] sm:$0xf]
      %vm1985 = vcmask 228352
      %v1987 = vsel %vm1985, %v1973, 0
      %v1990 = vsel %vm1985, %v1974, 0
      %v1993 = vsel %vm1985, %v1975, 0
      %v1996 = vsel %vm1985, %v1976, 0
      %v1999 = vsel %vm1985, %v1977, 0
      %v2002 = vsel %vm1985, %v1978, 0
      %v2005 = vsel %vm1985, %v1979, 0
      %v2008 = vsel %vm1985, %v1980, 0
      %vm2010 = vcmask 1043456
      %v2012 = vsel %vm2010, %v1984, 0
      %2014 = vmatprep.subr.mxu0 0.0
      %2015 = vmatpush1.msra.mxu0 0.0
      %2016 = vmatprep.subr.mxu0 0.0
      %2017 = vmatpush1.msra.mxu0 0.0
      %2018 = vmatprep.subr.mxu0 0.0
      %2019 = vmatpush1.msra.mxu0 0.0
      %2020 = vmatprep.subr.mxu0 0.0
      %2021 = vmatpush1.msra.mxu0 0.0
      %2022 = vmatprep.subr.mxu0 0.0
      %2023 = vmatpush1.msra.mxu0 0.0
      %2024 = vmatprep.subr.mxu0 0.0
      %2025 = vmatpush1.msra.mxu0 0.0
      %2026 = vmatprep.subr.mxu0 0.0
      %2027 = vmatpush1.msra.mxu0 0.0
      %2028 = vmatprep.subr.mxu0 0.0
      %2029 = vmatpush1.msra.mxu0 0.0
      %2030 = vmatprep.subr.mxu0 0.0
      %2031 = vmatpush1.msra.mxu0 0.0
      %2032 = vmatprep.subr.mxu0 0.0
      %2033 = vmatpush1.msra.mxu0 0.0
      %2034 = vmatprep.subr.mxu0 0.0
      %2035 = vmatpush1.msra.mxu0 0.0
      %2036 = vmatprep.subr.mxu0 0.0
      %2037 = vmatpush1.msra.mxu0 0.0
      %2038 = vmatprep.subr.mxu0 0.0
      %v2039 = vand.u32 %v2012, 4294901760
      %2040 = vmatpush1.msra.mxu0 %v2039
      %2041 = vmatprep.subr.mxu0 0.0
      %v2042 = vand.u32 %v1983, 4294901760
      %2043 = vmatpush1.msra.mxu0 %v2042
      %2044 = vmatprep.subr.mxu0 0.0
      %v2045 = vand.u32 %v1982, 4294901760
      %2046 = vmatpush1.msra.mxu0 %v2045
      %2047 = vmatprep.subr.mxu0 0.0
      %v2048 = vand.u32 %v1981, 4294901760
      %2049 = vmatpush1.msra.mxu0 %v2048
      %2050 = vmatprep.subr.mxu0 0.0
      %2051 = vmatpush2.msra.mxu0 0.0
      %2052 = vmatprep.subr.mxu0 0.0
      %2053 = vmatpush2.msra.mxu0 0.0
      %2054 = vmatprep.subr.mxu0 0.0
      %2055 = vmatpush2.msra.mxu0 0.0
      %2056 = vmatprep.subr.mxu0 0.0
      %2057 = vmatpush2.msra.mxu0 0.0
      %2058 = vmatprep.subr.mxu0 0.0
      %2059 = vmatpush2.msra.mxu0 0.0
      %2060 = vmatprep.subr.mxu0 0.0
      %2061 = vmatpush2.msra.mxu0 0.0
      %2062 = vmatprep.subr.mxu0 0.0
      %2063 = vmatpush2.msra.mxu0 0.0
      %2064 = vmatprep.subr.mxu0 0.0
      %2065 = vmatpush2.msra.mxu0 0.0
      %2066 = vmatprep.subr.mxu0 0.0
      %2067 = vmatpush2.msra.mxu0 0.0
      %2068 = vmatprep.subr.mxu0 0.0
      %2069 = vmatpush2.msra.mxu0 0.0
      %2070 = vmatprep.subr.mxu0 0.0
      %2071 = vmatpush2.msra.mxu0 0.0
      %2072 = vmatprep.subr.mxu0 0.0
      %2073 = vmatpush2.msra.mxu0 0.0
      %2074 = vmatprep.subr.mxu0 0.0
      %2075 = vmatpush2.msra.mxu0 0.0
      %2076 = vmatprep.subr.mxu0 0.0
      %2077 = vmatpush2.msra.mxu0 0.0
      %2078 = vmatprep.subr.mxu0 0.0
      %2079 = vmatpush2.msra.mxu0 0.0
      %2080 = vmatprep.subr.mxu0 0.0
      %2081 = vmatpush2.msra.mxu0 0.0
      %2082 = vmatprep.mubr.f32.mxu0 0.0
      %v2083 = vand.u32 %v1987, 4294901760
      %v2084 = vsub.f32 %v1987, %v2083
      %v2085 = vand.u32 %v2084, 4294901760
      %v2086 = vsub.f32 %v2084, %v2085
      %v2087 = vand.u32 %v2086, 4294901760
      %2088 = vmatmul.mubr.f32.gmra.mxu0 %v2087
      %v2089 = vpop.f32.mrf.mxu0
      %v2090 = vadd.f32 0.0, %v2089
      %v2091 = vpop.f32.mrf.mxu0
      %2092 = vmatprep.mubr.f32.mxu0 0.0
      %v2093 = vand.u32 %v1990, 4294901760
      %v2094 = vsub.f32 %v1990, %v2093
      %v2095 = vand.u32 %v2094, 4294901760
      %v2096 = vsub.f32 %v2094, %v2095
      %v2097 = vand.u32 %v2096, 4294901760
      %2098 = vmatmul.mubr.f32.gmra.mxu0 %v2097
      %v2099 = vpop.f32.mrf.mxu0
      %v2100 = vadd.f32 0.0, %v2099
      %v2101 = vpop.f32.mrf.mxu0
      %2102 = vmatprep.mubr.f32.mxu0 0.0
      %v2103 = vand.u32 %v1993, 4294901760
      %v2104 = vsub.f32 %v1993, %v2103
      %v2105 = vand.u32 %v2104, 4294901760
      %v2106 = vsub.f32 %v2104, %v2105
      %v2107 = vand.u32 %v2106, 4294901760
      %2108 = vmatmul.mubr.f32.gmra.mxu0 %v2107
      %v2109 = vpop.f32.mrf.mxu0
      %v2110 = vadd.f32 0.0, %v2109
      %v2111 = vpop.f32.mrf.mxu0
      %2112 = vmatprep.mubr.f32.mxu0 0.0
      %v2113 = vand.u32 %v1996, 4294901760
      %v2114 = vsub.f32 %v1996, %v2113
      %v2115 = vand.u32 %v2114, 4294901760
      %v2116 = vsub.f32 %v2114, %v2115
      %v2117 = vand.u32 %v2116, 4294901760
      %2118 = vmatmul.mubr.f32.gmra.mxu0 %v2117
      %v2119 = vpop.f32.mrf.mxu0
      %v2120 = vadd.f32 0.0, %v2119
      %v2121 = vpop.f32.mrf.mxu0
      %2122 = vmatprep.mubr.f32.mxu0 0.0
      %v2123 = vand.u32 %v1999, 4294901760
      %v2124 = vsub.f32 %v1999, %v2123
      %v2125 = vand.u32 %v2124, 4294901760
      %v2126 = vsub.f32 %v2124, %v2125
      %v2127 = vand.u32 %v2126, 4294901760
      %2128 = vmatmul.mubr.f32.gmra.mxu0 %v2127
      %v2129 = vpop.f32.mrf.mxu0
      %v2130 = vadd.f32 0.0, %v2129
      %v2131 = vpop.f32.mrf.mxu0
      %2132 = vmatprep.mubr.f32.mxu0 0.0
      %v2133 = vand.u32 %v2002, 4294901760
      %v2134 = vsub.f32 %v2002, %v2133
      %v2135 = vand.u32 %v2134, 4294901760
      %v2136 = vsub.f32 %v2134, %v2135
      %v2137 = vand.u32 %v2136, 4294901760
      %2138 = vmatmul.mubr.f32.gmra.mxu0 %v2137
      %v2139 = vpop.f32.mrf.mxu0
      %v2140 = vadd.f32 0.0, %v2139
      %v2141 = vpop.f32.mrf.mxu0
      %2142 = vmatprep.mubr.f32.mxu0 0.0
      %v2143 = vand.u32 %v2005, 4294901760
      %v2144 = vsub.f32 %v2005, %v2143
      %v2145 = vand.u32 %v2144, 4294901760
      %v2146 = vsub.f32 %v2144, %v2145
      %v2147 = vand.u32 %v2146, 4294901760
      %2148 = vmatmul.mubr.f32.gmra.mxu0 %v2147
      %v2149 = vpop.f32.mrf.mxu0
      %v2150 = vadd.f32 0.0, %v2149
      %v2151 = vpop.f32.mrf.mxu0
      %2152 = vmatprep.mubr.f32.mxu0 0.0
      %v2153 = vand.u32 %v2008, 4294901760
      %v2154 = vsub.f32 %v2008, %v2153
      %v2155 = vand.u32 %v2154, 4294901760
      %v2156 = vsub.f32 %v2154, %v2155
      %v2157 = vand.u32 %v2156, 4294901760
      %2158 = vmatmul.mubr.f32.gmra.mxu0 %v2157
      %v2159 = vpop.f32.mrf.mxu0
      %v2160 = vadd.f32 0.0, %v2159
      %v2161 = vpop.f32.mrf.mxu0
      %2162 = vdwg.mxu0
      %2163 = vmatprep.subr.mxu0 0.0
      %2164 = vmatpush1.msra.mxu0 0.0
      %2165 = vmatprep.subr.mxu0 0.0
      %2166 = vmatpush1.msra.mxu0 0.0
      %2167 = vmatprep.subr.mxu0 0.0
      %2168 = vmatpush1.msra.mxu0 0.0
      %2169 = vmatprep.subr.mxu0 0.0
      %2170 = vmatpush1.msra.mxu0 0.0
      %2171 = vmatprep.subr.mxu0 0.0
      %2172 = vmatpush1.msra.mxu0 0.0
      %2173 = vmatprep.subr.mxu0 0.0
      %2174 = vmatpush1.msra.mxu0 0.0
      %2175 = vmatprep.subr.mxu0 0.0
      %2176 = vmatpush1.msra.mxu0 0.0
      %2177 = vmatprep.subr.mxu0 0.0
      %2178 = vmatpush1.msra.mxu0 0.0
      %2179 = vmatprep.subr.mxu0 0.0
      %2180 = vmatpush1.msra.mxu0 0.0
      %2181 = vmatprep.subr.mxu0 0.0
      %2182 = vmatpush1.msra.mxu0 0.0
      %2183 = vmatprep.subr.mxu0 0.0
      %2184 = vmatpush1.msra.mxu0 0.0
      %2185 = vmatprep.subr.mxu0 0.0
      %2186 = vmatpush1.msra.mxu0 0.0
      %2187 = vmatprep.subr.mxu0 0.0
      %v2188 = vand.u32 %v2012, 4294901760
      %v2189 = vsub.f32 %v2012, %v2188
      %v2190 = vand.u32 %v2189, 4294901760
      %v2191 = vsub.f32 %v2189, %v2190
      %v2192 = vand.u32 %v2191, 4294901760
      %2193 = vmatpush1.msra.mxu0 %v2192
      %2194 = vmatprep.subr.mxu0 0.0
      %v2195 = vand.u32 %v1983, 4294901760
      %v2196 = vsub.f32 %v1983, %v2195
      %v2197 = vand.u32 %v2196, 4294901760
      %v2198 = vsub.f32 %v2196, %v2197
      %v2199 = vand.u32 %v2198, 4294901760
      %2200 = vmatpush1.msra.mxu0 %v2199
      %2201 = vmatprep.subr.mxu0 0.0
      %v2202 = vand.u32 %v1982, 4294901760
      %v2203 = vsub.f32 %v1982, %v2202
      %v2204 = vand.u32 %v2203, 4294901760
      %v2205 = vsub.f32 %v2203, %v2204
      %v2206 = vand.u32 %v2205, 4294901760
      %2207 = vmatpush1.msra.mxu0 %v2206
      %2208 = vmatprep.subr.mxu0 0.0
      %v2209 = vand.u32 %v1981, 4294901760
      %v2210 = vsub.f32 %v1981, %v2209
      %v2211 = vand.u32 %v2210, 4294901760
      %v2212 = vsub.f32 %v2210, %v2211
      %v2213 = vand.u32 %v2212, 4294901760
      %2214 = vmatpush1.msra.mxu0 %v2213
      %2215 = vmatprep.subr.mxu0 0.0
      %2216 = vmatpush2.msra.mxu0 0.0
      %2217 = vmatprep.subr.mxu0 0.0
      %2218 = vmatpush2.msra.mxu0 0.0
      %2219 = vmatprep.subr.mxu0 0.0
      %2220 = vmatpush2.msra.mxu0 0.0
      %2221 = vmatprep.subr.mxu0 0.0
      %2222 = vmatpush2.msra.mxu0 0.0
      %2223 = vmatprep.subr.mxu0 0.0
      %2224 = vmatpush2.msra.mxu0 0.0
      %2225 = vmatprep.subr.mxu0 0.0
      %2226 = vmatpush2.msra.mxu0 0.0
      %2227 = vmatprep.subr.mxu0 0.0
      %2228 = vmatpush2.msra.mxu0 0.0
      %2229 = vmatprep.subr.mxu0 0.0
      %2230 = vmatpush2.msra.mxu0 0.0
      %2231 = vmatprep.subr.mxu0 0.0
      %2232 = vmatpush2.msra.mxu0 0.0
      %2233 = vmatprep.subr.mxu0 0.0
      %2234 = vmatpush2.msra.mxu0 0.0
      %2235 = vmatprep.subr.mxu0 0.0
      %2236 = vmatpush2.msra.mxu0 0.0
      %2237 = vmatprep.subr.mxu0 0.0
      %2238 = vmatpush2.msra.mxu0 0.0
      %2239 = vmatprep.subr.mxu0 0.0
      %2240 = vmatpush2.msra.mxu0 0.0
      %2241 = vmatprep.subr.mxu0 0.0
      %2242 = vmatpush2.msra.mxu0 0.0
      %2243 = vmatprep.subr.mxu0 0.0
      %2244 = vmatpush2.msra.mxu0 0.0
      %2245 = vmatprep.subr.mxu0 0.0
      %2246 = vmatpush2.msra.mxu0 0.0
      %2247 = vmatprep.mubr.f32.mxu0 0.0
      %v2248 = vand.u32 %v1987, 4294901760
      %2249 = vmatmul.mubr.f32.gmra.mxu0 %v2248
      %v2250 = vpop.f32.mrf.mxu0
      %v2251 = vadd.f32 %v2090, %v2250
      %v2252 = vpop.f32.mrf.mxu0
      %2253 = vmatprep.mubr.f32.mxu0 0.0
      %v2254 = vand.u32 %v1990, 4294901760
      %2255 = vmatmul.mubr.f32.gmra.mxu0 %v2254
      %v2256 = vpop.f32.mrf.mxu0
      %v2257 = vadd.f32 %v2100, %v2256
      %v2258 = vpop.f32.mrf.mxu0
      %2259 = vmatprep.mubr.f32.mxu0 0.0
      %v2260 = vand.u32 %v1993, 4294901760
      %2261 = vmatmul.mubr.f32.gmra.mxu0 %v2260
      %v2262 = vpop.f32.mrf.mxu0
      %v2263 = vadd.f32 %v2110, %v2262
      %v2264 = vpop.f32.mrf.mxu0
      %2265 = vmatprep.mubr.f32.mxu0 0.0
      %v2266 = vand.u32 %v1996, 4294901760
      %2267 = vmatmul.mubr.f32.gmra.mxu0 %v2266
      %v2268 = vpop.f32.mrf.mxu0
      %v2269 = vadd.f32 %v2120, %v2268
      %v2270 = vpop.f32.mrf.mxu0
      %2271 = vmatprep.mubr.f32.mxu0 0.0
      %v2272 = vand.u32 %v1999, 4294901760
      %2273 = vmatmul.mubr.f32.gmra.mxu0 %v2272
      %v2274 = vpop.f32.mrf.mxu0
      %v2275 = vadd.f32 %v2130, %v2274
      %v2276 = vpop.f32.mrf.mxu0
      %2277 = vmatprep.mubr.f32.mxu0 0.0
      %v2278 = vand.u32 %v2002, 4294901760
      %2279 = vmatmul.mubr.f32.gmra.mxu0 %v2278
      %v2280 = vpop.f32.mrf.mxu0
      %v2281 = vadd.f32 %v2140, %v2280
      %v2282 = vpop.f32.mrf.mxu0
      %2283 = vmatprep.mubr.f32.mxu0 0.0
      %v2284 = vand.u32 %v2005, 4294901760
      %2285 = vmatmul.mubr.f32.gmra.mxu0 %v2284
      %v2286 = vpop.f32.mrf.mxu0
      %v2287 = vadd.f32 %v2150, %v2286
      %v2288 = vpop.f32.mrf.mxu0
      %2289 = vmatprep.mubr.f32.mxu0 0.0
      %v2290 = vand.u32 %v2008, 4294901760
      %2291 = vmatmul.mubr.f32.gmra.mxu0 %v2290
      %v2292 = vpop.f32.mrf.mxu0
      %v2293 = vadd.f32 %v2160, %v2292
      %v2294 = vpop.f32.mrf.mxu0
      %2295 = vdwg.mxu0
      %2296 = vmatprep.subr.mxu0 0.0
      %2297 = vmatpush1.msra.mxu0 0.0
      %2298 = vmatprep.subr.mxu0 0.0
      %2299 = vmatpush1.msra.mxu0 0.0
      %2300 = vmatprep.subr.mxu0 0.0
      %2301 = vmatpush1.msra.mxu0 0.0
      %2302 = vmatprep.subr.mxu0 0.0
      %2303 = vmatpush1.msra.mxu0 0.0
      %2304 = vmatprep.subr.mxu0 0.0
      %2305 = vmatpush1.msra.mxu0 0.0
      %2306 = vmatprep.subr.mxu0 0.0
      %2307 = vmatpush1.msra.mxu0 0.0
      %2308 = vmatprep.subr.mxu0 0.0
      %2309 = vmatpush1.msra.mxu0 0.0
      %2310 = vmatprep.subr.mxu0 0.0
      %2311 = vmatpush1.msra.mxu0 0.0
      %2312 = vmatprep.subr.mxu0 0.0
      %2313 = vmatpush1.msra.mxu0 0.0
      %2314 = vmatprep.subr.mxu0 0.0
      %2315 = vmatpush1.msra.mxu0 0.0
      %2316 = vmatprep.subr.mxu0 0.0
      %2317 = vmatpush1.msra.mxu0 0.0
      %2318 = vmatprep.subr.mxu0 0.0
      %2319 = vmatpush1.msra.mxu0 0.0
      %2320 = vmatprep.subr.mxu0 0.0
      %v2321 = vand.u32 %v2012, 4294901760
      %v2322 = vsub.f32 %v2012, %v2321
      %2323 = vmatpush1.msra.mxu0 %v2322
      %2324 = vmatprep.subr.mxu0 0.0
      %v2325 = vand.u32 %v1983, 4294901760
      %v2326 = vsub.f32 %v1983, %v2325
      %2327 = vmatpush1.msra.mxu0 %v2326
      %2328 = vmatprep.subr.mxu0 0.0
      %v2329 = vand.u32 %v1982, 4294901760
      %v2330 = vsub.f32 %v1982, %v2329
      %2331 = vmatpush1.msra.mxu0 %v2330
      %2332 = vmatprep.subr.mxu0 0.0
      %v2333 = vand.u32 %v1981, 4294901760
      %v2334 = vsub.f32 %v1981, %v2333
      %2335 = vmatpush1.msra.mxu0 %v2334
      %2336 = vmatprep.subr.mxu0 0.0
      %2337 = vmatpush2.msra.mxu0 0.0
      %2338 = vmatprep.subr.mxu0 0.0
      %2339 = vmatpush2.msra.mxu0 0.0
      %2340 = vmatprep.subr.mxu0 0.0
      %2341 = vmatpush2.msra.mxu0 0.0
      %2342 = vmatprep.subr.mxu0 0.0
      %2343 = vmatpush2.msra.mxu0 0.0
      %2344 = vmatprep.subr.mxu0 0.0
      %2345 = vmatpush2.msra.mxu0 0.0
      %2346 = vmatprep.subr.mxu0 0.0
      %2347 = vmatpush2.msra.mxu0 0.0
      %2348 = vmatprep.subr.mxu0 0.0
      %2349 = vmatpush2.msra.mxu0 0.0
      %2350 = vmatprep.subr.mxu0 0.0
      %2351 = vmatpush2.msra.mxu0 0.0
      %2352 = vmatprep.subr.mxu0 0.0
      %2353 = vmatpush2.msra.mxu0 0.0
      %2354 = vmatprep.subr.mxu0 0.0
      %2355 = vmatpush2.msra.mxu0 0.0
      %2356 = vmatprep.subr.mxu0 0.0
      %2357 = vmatpush2.msra.mxu0 0.0
      %2358 = vmatprep.subr.mxu0 0.0
      %2359 = vmatpush2.msra.mxu0 0.0
      %2360 = vmatprep.subr.mxu0 0.0
      %2361 = vmatpush2.msra.mxu0 0.0
      %2362 = vmatprep.subr.mxu0 0.0
      %2363 = vmatpush2.msra.mxu0 0.0
      %2364 = vmatprep.subr.mxu0 0.0
      %2365 = vmatpush2.msra.mxu0 0.0
      %2366 = vmatprep.subr.mxu0 0.0
      %2367 = vmatpush2.msra.mxu0 0.0
      %2368 = vmatprep.mubr.f32.mxu0 0.0
      %v2369 = vand.u32 %v1987, 4294901760
      %v2370 = vsub.f32 %v1987, %v2369
      %2371 = vmatmul.mubr.f32.gmra.mxu0 %v2370
      %v2372 = vpop.f32.mrf.mxu0
      %v2373 = vadd.f32 %v2251, %v2372
      %v2374 = vpop.f32.mrf.mxu0
      %2375 = vmatprep.mubr.f32.mxu0 0.0
      %v2376 = vand.u32 %v1990, 4294901760
      %v2377 = vsub.f32 %v1990, %v2376
      %2378 = vmatmul.mubr.f32.gmra.mxu0 %v2377
      %v2379 = vpop.f32.mrf.mxu0
      %v2380 = vadd.f32 %v2257, %v2379
      %v2381 = vpop.f32.mrf.mxu0
      %2382 = vmatprep.mubr.f32.mxu0 0.0
      %v2383 = vand.u32 %v1993, 4294901760
      %v2384 = vsub.f32 %v1993, %v2383
      %2385 = vmatmul.mubr.f32.gmra.mxu0 %v2384
      %v2386 = vpop.f32.mrf.mxu0
      %v2387 = vadd.f32 %v2263, %v2386
      %v2388 = vpop.f32.mrf.mxu0
      %2389 = vmatprep.mubr.f32.mxu0 0.0
      %v2390 = vand.u32 %v1996, 4294901760
      %v2391 = vsub.f32 %v1996, %v2390
      %2392 = vmatmul.mubr.f32.gmra.mxu0 %v2391
      %v2393 = vpop.f32.mrf.mxu0
      %v2394 = vadd.f32 %v2269, %v2393
      %v2395 = vpop.f32.mrf.mxu0
      %2396 = vmatprep.mubr.f32.mxu0 0.0
      %v2397 = vand.u32 %v1999, 4294901760
      %v2398 = vsub.f32 %v1999, %v2397
      %2399 = vmatmul.mubr.f32.gmra.mxu0 %v2398
      %v2400 = vpop.f32.mrf.mxu0
      %v2401 = vadd.f32 %v2275, %v2400
      %v2402 = vpop.f32.mrf.mxu0
      %2403 = vmatprep.mubr.f32.mxu0 0.0
      %v2404 = vand.u32 %v2002, 4294901760
      %v2405 = vsub.f32 %v2002, %v2404
      %2406 = vmatmul.mubr.f32.gmra.mxu0 %v2405
      %v2407 = vpop.f32.mrf.mxu0
      %v2408 = vadd.f32 %v2281, %v2407
      %v2409 = vpop.f32.mrf.mxu0
      %2410 = vmatprep.mubr.f32.mxu0 0.0
      %v2411 = vand.u32 %v2005, 4294901760
      %v2412 = vsub.f32 %v2005, %v2411
      %2413 = vmatmul.mubr.f32.gmra.mxu0 %v2412
      %v2414 = vpop.f32.mrf.mxu0
      %v2415 = vadd.f32 %v2287, %v2414
      %v2416 = vpop.f32.mrf.mxu0
      %2417 = vmatprep.mubr.f32.mxu0 0.0
      %v2418 = vand.u32 %v2008, 4294901760
      %v2419 = vsub.f32 %v2008, %v2418
      %2420 = vmatmul.mubr.f32.gmra.mxu0 %v2419
      %v2421 = vpop.f32.mrf.mxu0
      %v2422 = vadd.f32 %v2293, %v2421
      %v2423 = vpop.f32.mrf.mxu0
      %2424 = vdwg.mxu0
      %2425 = vmatprep.subr.mxu0 0.0
      %2426 = vmatpush1.msra.mxu0 0.0
      %2427 = vmatprep.subr.mxu0 0.0
      %2428 = vmatpush1.msra.mxu0 0.0
      %2429 = vmatprep.subr.mxu0 0.0
      %2430 = vmatpush1.msra.mxu0 0.0
      %2431 = vmatprep.subr.mxu0 0.0
      %2432 = vmatpush1.msra.mxu0 0.0
      %2433 = vmatprep.subr.mxu0 0.0
      %2434 = vmatpush1.msra.mxu0 0.0
      %2435 = vmatprep.subr.mxu0 0.0
      %2436 = vmatpush1.msra.mxu0 0.0
      %2437 = vmatprep.subr.mxu0 0.0
      %2438 = vmatpush1.msra.mxu0 0.0
      %2439 = vmatprep.subr.mxu0 0.0
      %2440 = vmatpush1.msra.mxu0 0.0
      %2441 = vmatprep.subr.mxu0 0.0
      %2442 = vmatpush1.msra.mxu0 0.0
      %2443 = vmatprep.subr.mxu0 0.0
      %2444 = vmatpush1.msra.mxu0 0.0
      %2445 = vmatprep.subr.mxu0 0.0
      %2446 = vmatpush1.msra.mxu0 0.0
      %2447 = vmatprep.subr.mxu0 0.0
      %2448 = vmatpush1.msra.mxu0 0.0
      %2449 = vmatprep.subr.mxu0 0.0
      %v2450 = vand.u32 %v2012, 4294901760
      %2451 = vmatpush1.msra.mxu0 %v2450
      %2452 = vmatprep.subr.mxu0 0.0
      %v2453 = vand.u32 %v1983, 4294901760
      %2454 = vmatpush1.msra.mxu0 %v2453
      %2455 = vmatprep.subr.mxu0 0.0
      %v2456 = vand.u32 %v1982, 4294901760
      %2457 = vmatpush1.msra.mxu0 %v2456
      %2458 = vmatprep.subr.mxu0 0.0
      %v2459 = vand.u32 %v1981, 4294901760
      %2460 = vmatpush1.msra.mxu0 %v2459
      %2461 = vmatprep.subr.mxu0 0.0
      %2462 = vmatpush2.msra.mxu0 0.0
      %2463 = vmatprep.subr.mxu0 0.0
      %2464 = vmatpush2.msra.mxu0 0.0
      %2465 = vmatprep.subr.mxu0 0.0
      %2466 = vmatpush2.msra.mxu0 0.0
      %2467 = vmatprep.subr.mxu0 0.0
      %2468 = vmatpush2.msra.mxu0 0.0
      %2469 = vmatprep.subr.mxu0 0.0
      %2470 = vmatpush2.msra.mxu0 0.0
      %2471 = vmatprep.subr.mxu0 0.0
      %2472 = vmatpush2.msra.mxu0 0.0
      %2473 = vmatprep.subr.mxu0 0.0
      %2474 = vmatpush2.msra.mxu0 0.0
      %2475 = vmatprep.subr.mxu0 0.0
      %2476 = vmatpush2.msra.mxu0 0.0
      %2477 = vmatprep.subr.mxu0 0.0
      %2478 = vmatpush2.msra.mxu0 0.0
      %2479 = vmatprep.subr.mxu0 0.0
      %2480 = vmatpush2.msra.mxu0 0.0
      %2481 = vmatprep.subr.mxu0 0.0
      %2482 = vmatpush2.msra.mxu0 0.0
      %2483 = vmatprep.subr.mxu0 0.0
      %2484 = vmatpush2.msra.mxu0 0.0
      %2485 = vmatprep.subr.mxu0 0.0
      %2486 = vmatpush2.msra.mxu0 0.0
      %2487 = vmatprep.subr.mxu0 0.0
      %2488 = vmatpush2.msra.mxu0 0.0
      %2489 = vmatprep.subr.mxu0 0.0
      %2490 = vmatpush2.msra.mxu0 0.0
      %2491 = vmatprep.subr.mxu0 0.0
      %2492 = vmatpush2.msra.mxu0 0.0
      %2493 = vmatprep.mubr.f32.mxu0 0.0
      %v2494 = vand.u32 %v1987, 4294901760
      %v2495 = vsub.f32 %v1987, %v2494
      %v2496 = vand.u32 %v2495, 4294901760
      %2497 = vmatmul.mubr.f32.gmra.mxu0 %v2496
      %v2498 = vpop.f32.mrf.mxu0
      %v2499 = vadd.f32 %v2373, %v2498
      %v2500 = vpop.f32.mrf.mxu0
      %2501 = vmatprep.mubr.f32.mxu0 0.0
      %v2502 = vand.u32 %v1990, 4294901760
      %v2503 = vsub.f32 %v1990, %v2502
      %v2504 = vand.u32 %v2503, 4294901760
      %2505 = vmatmul.mubr.f32.gmra.mxu0 %v2504
      %v2506 = vpop.f32.mrf.mxu0
      %v2507 = vadd.f32 %v2380, %v2506
      %v2508 = vpop.f32.mrf.mxu0
      %2509 = vmatprep.mubr.f32.mxu0 0.0
      %v2510 = vand.u32 %v1993, 4294901760
      %v2511 = vsub.f32 %v1993, %v2510
      %v2512 = vand.u32 %v2511, 4294901760
      %2513 = vmatmul.mubr.f32.gmra.mxu0 %v2512
      %v2514 = vpop.f32.mrf.mxu0
      %v2515 = vadd.f32 %v2387, %v2514
      %v2516 = vpop.f32.mrf.mxu0
      %2517 = vmatprep.mubr.f32.mxu0 0.0
      %v2518 = vand.u32 %v1996, 4294901760
      %v2519 = vsub.f32 %v1996, %v2518
      %v2520 = vand.u32 %v2519, 4294901760
      %2521 = vmatmul.mubr.f32.gmra.mxu0 %v2520
      %v2522 = vpop.f32.mrf.mxu0
      %v2523 = vadd.f32 %v2394, %v2522
      %v2524 = vpop.f32.mrf.mxu0
      %2525 = vmatprep.mubr.f32.mxu0 0.0
      %v2526 = vand.u32 %v1999, 4294901760
      %v2527 = vsub.f32 %v1999, %v2526
      %v2528 = vand.u32 %v2527, 4294901760
      %2529 = vmatmul.mubr.f32.gmra.mxu0 %v2528
      %v2530 = vpop.f32.mrf.mxu0
      %v2531 = vadd.f32 %v2401, %v2530
      %v2532 = vpop.f32.mrf.mxu0
      %2533 = vmatprep.mubr.f32.mxu0 0.0
      %v2534 = vand.u32 %v2002, 4294901760
      %v2535 = vsub.f32 %v2002, %v2534
      %v2536 = vand.u32 %v2535, 4294901760
      %2537 = vmatmul.mubr.f32.gmra.mxu0 %v2536
      %v2538 = vpop.f32.mrf.mxu0
      %v2539 = vadd.f32 %v2408, %v2538
      %v2540 = vpop.f32.mrf.mxu0
      %2541 = vmatprep.mubr.f32.mxu0 0.0
      %v2542 = vand.u32 %v2005, 4294901760
      %v2543 = vsub.f32 %v2005, %v2542
      %v2544 = vand.u32 %v2543, 4294901760
      %2545 = vmatmul.mubr.f32.gmra.mxu0 %v2544
      %v2546 = vpop.f32.mrf.mxu0
      %v2547 = vadd.f32 %v2415, %v2546
      %v2548 = vpop.f32.mrf.mxu0
      %2549 = vmatprep.mubr.f32.mxu0 0.0
      %v2550 = vand.u32 %v2008, 4294901760
      %v2551 = vsub.f32 %v2008, %v2550
      %v2552 = vand.u32 %v2551, 4294901760
      %2553 = vmatmul.mubr.f32.gmra.mxu0 %v2552
      %v2554 = vpop.f32.mrf.mxu0
      %v2555 = vadd.f32 %v2422, %v2554
      %v2556 = vpop.f32.mrf.mxu0
      %2557 = vdwg.mxu0
      %2558 = vmatprep.subr.mxu0 0.0
      %2559 = vmatpush1.msra.mxu0 0.0
      %2560 = vmatprep.subr.mxu0 0.0
      %2561 = vmatpush1.msra.mxu0 0.0
      %2562 = vmatprep.subr.mxu0 0.0
      %2563 = vmatpush1.msra.mxu0 0.0
      %2564 = vmatprep.subr.mxu0 0.0
      %2565 = vmatpush1.msra.mxu0 0.0
      %2566 = vmatprep.subr.mxu0 0.0
      %2567 = vmatpush1.msra.mxu0 0.0
      %2568 = vmatprep.subr.mxu0 0.0
      %2569 = vmatpush1.msra.mxu0 0.0
      %2570 = vmatprep.subr.mxu0 0.0
      %2571 = vmatpush1.msra.mxu0 0.0
      %2572 = vmatprep.subr.mxu0 0.0
      %2573 = vmatpush1.msra.mxu0 0.0
      %2574 = vmatprep.subr.mxu0 0.0
      %2575 = vmatpush1.msra.mxu0 0.0
      %2576 = vmatprep.subr.mxu0 0.0
      %2577 = vmatpush1.msra.mxu0 0.0
      %2578 = vmatprep.subr.mxu0 0.0
      %2579 = vmatpush1.msra.mxu0 0.0
      %2580 = vmatprep.subr.mxu0 0.0
      %2581 = vmatpush1.msra.mxu0 0.0
      %2582 = vmatprep.subr.mxu0 0.0
      %v2583 = vand.u32 %v2012, 4294901760
      %v2584 = vsub.f32 %v2012, %v2583
      %v2585 = vand.u32 %v2584, 4294901760
      %2586 = vmatpush1.msra.mxu0 %v2585
      %2587 = vmatprep.subr.mxu0 0.0
      %v2588 = vand.u32 %v1983, 4294901760
      %v2589 = vsub.f32 %v1983, %v2588
      %v2590 = vand.u32 %v2589, 4294901760
      %2591 = vmatpush1.msra.mxu0 %v2590
      %2592 = vmatprep.subr.mxu0 0.0
      %v2593 = vand.u32 %v1982, 4294901760
      %v2594 = vsub.f32 %v1982, %v2593
      %v2595 = vand.u32 %v2594, 4294901760
      %2596 = vmatpush1.msra.mxu0 %v2595
      %2597 = vmatprep.subr.mxu0 0.0
      %v2598 = vand.u32 %v1981, 4294901760
      %v2599 = vsub.f32 %v1981, %v2598
      %v2600 = vand.u32 %v2599, 4294901760
      %2601 = vmatpush1.msra.mxu0 %v2600
      %2602 = vmatprep.subr.mxu0 0.0
      %2603 = vmatpush2.msra.mxu0 0.0
      %2604 = vmatprep.subr.mxu0 0.0
      %2605 = vmatpush2.msra.mxu0 0.0
      %2606 = vmatprep.subr.mxu0 0.0
      %2607 = vmatpush2.msra.mxu0 0.0
      %2608 = vmatprep.subr.mxu0 0.0
      %2609 = vmatpush2.msra.mxu0 0.0
      %2610 = vmatprep.subr.mxu0 0.0
      %2611 = vmatpush2.msra.mxu0 0.0
      %2612 = vmatprep.subr.mxu0 0.0
      %2613 = vmatpush2.msra.mxu0 0.0
      %2614 = vmatprep.subr.mxu0 0.0
      %2615 = vmatpush2.msra.mxu0 0.0
      %2616 = vmatprep.subr.mxu0 0.0
      %2617 = vmatpush2.msra.mxu0 0.0
      %2618 = vmatprep.subr.mxu0 0.0
      %2619 = vmatpush2.msra.mxu0 0.0
      %2620 = vmatprep.subr.mxu0 0.0
      %2621 = vmatpush2.msra.mxu0 0.0
      %2622 = vmatprep.subr.mxu0 0.0
      %2623 = vmatpush2.msra.mxu0 0.0
      %2624 = vmatprep.subr.mxu0 0.0
      %2625 = vmatpush2.msra.mxu0 0.0
      %2626 = vmatprep.subr.mxu0 0.0
      %2627 = vmatpush2.msra.mxu0 0.0
      %2628 = vmatprep.subr.mxu0 0.0
      %2629 = vmatpush2.msra.mxu0 0.0
      %2630 = vmatprep.subr.mxu0 0.0
      %2631 = vmatpush2.msra.mxu0 0.0
      %2632 = vmatprep.subr.mxu0 0.0
      %2633 = vmatpush2.msra.mxu0 0.0
      %2634 = vmatprep.mubr.f32.mxu0 0.0
      %v2635 = vand.u32 %v1987, 4294901760
      %2636 = vmatmul.mubr.f32.gmra.mxu0 %v2635
      %v2637 = vpop.f32.mrf.mxu0
      %v2638 = vadd.f32 %v2499, %v2637
      %v2639 = vpop.f32.mrf.mxu0
      %2640 = vmatprep.mubr.f32.mxu0 0.0
      %v2641 = vand.u32 %v1990, 4294901760
      %2642 = vmatmul.mubr.f32.gmra.mxu0 %v2641
      %v2643 = vpop.f32.mrf.mxu0
      %v2644 = vadd.f32 %v2507, %v2643
      %v2645 = vpop.f32.mrf.mxu0
      %2646 = vmatprep.mubr.f32.mxu0 0.0
      %v2647 = vand.u32 %v1993, 4294901760
      %2648 = vmatmul.mubr.f32.gmra.mxu0 %v2647
      %v2649 = vpop.f32.mrf.mxu0
      %v2650 = vadd.f32 %v2515, %v2649
      %v2651 = vpop.f32.mrf.mxu0
      %2652 = vmatprep.mubr.f32.mxu0 0.0
      %v2653 = vand.u32 %v1996, 4294901760
      %2654 = vmatmul.mubr.f32.gmra.mxu0 %v2653
      %v2655 = vpop.f32.mrf.mxu0
      %v2656 = vadd.f32 %v2523, %v2655
      %v2657 = vpop.f32.mrf.mxu0
      %2658 = vmatprep.mubr.f32.mxu0 0.0
      %v2659 = vand.u32 %v1999, 4294901760
      %2660 = vmatmul.mubr.f32.gmra.mxu0 %v2659
      %v2661 = vpop.f32.mrf.mxu0
      %v2662 = vadd.f32 %v2531, %v2661
      %v2663 = vpop.f32.mrf.mxu0
      %2664 = vmatprep.mubr.f32.mxu0 0.0
      %v2665 = vand.u32 %v2002, 4294901760
      %2666 = vmatmul.mubr.f32.gmra.mxu0 %v2665
      %v2667 = vpop.f32.mrf.mxu0
      %v2668 = vadd.f32 %v2539, %v2667
      %v2669 = vpop.f32.mrf.mxu0
      %2670 = vmatprep.mubr.f32.mxu0 0.0
      %v2671 = vand.u32 %v2005, 4294901760
      %2672 = vmatmul.mubr.f32.gmra.mxu0 %v2671
      %v2673 = vpop.f32.mrf.mxu0
      %v2674 = vadd.f32 %v2547, %v2673
      %v2675 = vpop.f32.mrf.mxu0
      %2676 = vmatprep.mubr.f32.mxu0 0.0
      %v2677 = vand.u32 %v2008, 4294901760
      %2678 = vmatmul.mubr.f32.gmra.mxu0 %v2677
      %v2679 = vpop.f32.mrf.mxu0
      %v2680 = vadd.f32 %v2555, %v2679
      %v2681 = vpop.f32.mrf.mxu0
      %2682 = vdwg.mxu0
      %2683 = vmatprep.subr.mxu0 0.0
      %2684 = vmatpush1.msra.mxu0 0.0
      %2685 = vmatprep.subr.mxu0 0.0
      %2686 = vmatpush1.msra.mxu0 0.0
      %2687 = vmatprep.subr.mxu0 0.0
      %2688 = vmatpush1.msra.mxu0 0.0
      %2689 = vmatprep.subr.mxu0 0.0
      %2690 = vmatpush1.msra.mxu0 0.0
      %2691 = vmatprep.subr.mxu0 0.0
      %2692 = vmatpush1.msra.mxu0 0.0
      %2693 = vmatprep.subr.mxu0 0.0
      %2694 = vmatpush1.msra.mxu0 0.0
      %2695 = vmatprep.subr.mxu0 0.0
      %2696 = vmatpush1.msra.mxu0 0.0
      %2697 = vmatprep.subr.mxu0 0.0
      %2698 = vmatpush1.msra.mxu0 0.0
      %2699 = vmatprep.subr.mxu0 0.0
      %2700 = vmatpush1.msra.mxu0 0.0
      %2701 = vmatprep.subr.mxu0 0.0
      %2702 = vmatpush1.msra.mxu0 0.0
      %2703 = vmatprep.subr.mxu0 0.0
      %2704 = vmatpush1.msra.mxu0 0.0
      %2705 = vmatprep.subr.mxu0 0.0
      %2706 = vmatpush1.msra.mxu0 0.0
      %2707 = vmatprep.subr.mxu0 0.0
      %v2708 = vand.u32 %v2012, 4294901760
      %2709 = vmatpush1.msra.mxu0 %v2708
      %2710 = vmatprep.subr.mxu0 0.0
      %v2711 = vand.u32 %v1983, 4294901760
      %2712 = vmatpush1.msra.mxu0 %v2711
      %2713 = vmatprep.subr.mxu0 0.0
      %v2714 = vand.u32 %v1982, 4294901760
      %2715 = vmatpush1.msra.mxu0 %v2714
      %2716 = vmatprep.subr.mxu0 0.0
      %v2717 = vand.u32 %v1981, 4294901760
      %2718 = vmatpush1.msra.mxu0 %v2717
      %2719 = vmatprep.subr.mxu0 0.0
      %2720 = vmatpush2.msra.mxu0 0.0
      %2721 = vmatprep.subr.mxu0 0.0
      %2722 = vmatpush2.msra.mxu0 0.0
      %2723 = vmatprep.subr.mxu0 0.0
      %2724 = vmatpush2.msra.mxu0 0.0
      %2725 = vmatprep.subr.mxu0 0.0
      %2726 = vmatpush2.msra.mxu0 0.0
      %2727 = vmatprep.subr.mxu0 0.0
      %2728 = vmatpush2.msra.mxu0 0.0
      %2729 = vmatprep.subr.mxu0 0.0
      %2730 = vmatpush2.msra.mxu0 0.0
      %2731 = vmatprep.subr.mxu0 0.0
      %2732 = vmatpush2.msra.mxu0 0.0
      %2733 = vmatprep.subr.mxu0 0.0
      %2734 = vmatpush2.msra.mxu0 0.0
      %2735 = vmatprep.subr.mxu0 0.0
      %2736 = vmatpush2.msra.mxu0 0.0
      %2737 = vmatprep.subr.mxu0 0.0
      %2738 = vmatpush2.msra.mxu0 0.0
      %2739 = vmatprep.subr.mxu0 0.0
      %2740 = vmatpush2.msra.mxu0 0.0
      %2741 = vmatprep.subr.mxu0 0.0
      %2742 = vmatpush2.msra.mxu0 0.0
      %2743 = vmatprep.subr.mxu0 0.0
      %2744 = vmatpush2.msra.mxu0 0.0
      %2745 = vmatprep.subr.mxu0 0.0
      %2746 = vmatpush2.msra.mxu0 0.0
      %2747 = vmatprep.subr.mxu0 0.0
      %2748 = vmatpush2.msra.mxu0 0.0
      %2749 = vmatprep.subr.mxu0 0.0
      %2750 = vmatpush2.msra.mxu0 0.0
      %2751 = vmatprep.mubr.f32.mxu0 0.0
      %v2752 = vand.u32 %v1987, 4294901760
      %2753 = vmatmul.mubr.f32.gmra.mxu0 %v2752
      %v2754 = vpop.f32.mrf.mxu0
      %v2755 = vadd.f32 %v2638, %v2754
      %v2756 = vpop.f32.mrf.mxu0
      %2757 = vmatprep.mubr.f32.mxu0 0.0
      %v2758 = vand.u32 %v1990, 4294901760
      %2759 = vmatmul.mubr.f32.gmra.mxu0 %v2758
      %v2760 = vpop.f32.mrf.mxu0
      %v2761 = vadd.f32 %v2644, %v2760
      %v2762 = vpop.f32.mrf.mxu0
      %2763 = vmatprep.mubr.f32.mxu0 0.0
      %v2764 = vand.u32 %v1993, 4294901760
      %2765 = vmatmul.mubr.f32.gmra.mxu0 %v2764
      %v2766 = vpop.f32.mrf.mxu0
      %v2767 = vadd.f32 %v2650, %v2766
      %v2768 = vpop.f32.mrf.mxu0
      %2769 = vmatprep.mubr.f32.mxu0 0.0
      %v2770 = vand.u32 %v1996, 4294901760
      %2771 = vmatmul.mubr.f32.gmra.mxu0 %v2770
      %v2772 = vpop.f32.mrf.mxu0
      %v2773 = vadd.f32 %v2656, %v2772
      %v2774 = vpop.f32.mrf.mxu0
      %2775 = vmatprep.mubr.f32.mxu0 0.0
      %v2776 = vand.u32 %v1999, 4294901760
      %2777 = vmatmul.mubr.f32.gmra.mxu0 %v2776
      %v2778 = vpop.f32.mrf.mxu0
      %v2779 = vadd.f32 %v2662, %v2778
      %v2780 = vpop.f32.mrf.mxu0
      %2781 = vmatprep.mubr.f32.mxu0 0.0
      %v2782 = vand.u32 %v2002, 4294901760
      %2783 = vmatmul.mubr.f32.gmra.mxu0 %v2782
      %v2784 = vpop.f32.mrf.mxu0
      %v2785 = vadd.f32 %v2668, %v2784
      %v2786 = vpop.f32.mrf.mxu0
      %2787 = vmatprep.mubr.f32.mxu0 0.0
      %v2788 = vand.u32 %v2005, 4294901760
      %2789 = vmatmul.mubr.f32.gmra.mxu0 %v2788
      %v2790 = vpop.f32.mrf.mxu0
      %v2791 = vadd.f32 %v2674, %v2790
      %v2792 = vpop.f32.mrf.mxu0
      %2793 = vmatprep.mubr.f32.mxu0 0.0
      %v2794 = vand.u32 %v2008, 4294901760
      %2795 = vmatmul.mubr.f32.gmra.mxu0 %v2794
      %v2796 = vpop.f32.mrf.mxu0
      %v2797 = vadd.f32 %v2680, %v2796
      %v2798 = vpop.f32.mrf.mxu0
      %2799 = vdwg.mxu0
      %vm2800 = vcmask 31744
      %2801 = vst.msk [vmem:[%s253] sm:$0xff] %vm2800, %v2755
      %2802 = vst.msk [vmem:[%s253 + $0x8] sm:$0xff] %vm2800, %v2761
      %2803 = vst.msk [vmem:[%s253 + $0x10] sm:$0xff] %vm2800, %v2767
      %2804 = vst.msk [vmem:[%s253 + $0x18] sm:$0xff] %vm2800, %v2773
      %2805 = vst.msk [vmem:[%s253 + $0x20] sm:$0xff] %vm2800, %v2779
      %2806 = vst.msk [vmem:[%s253 + $0x28] sm:$0xff] %vm2800, %v2785
      %2807 = vst.msk [vmem:[%s253 + $0x30] sm:$0xff] %vm2800, %v2791
      %2808 = vst.msk [vmem:[%s253 + $0x38] sm:$0xff] %vm2800, %v2797
      %s2809 = smul.u32 8, %s17
      %p2810 = scmp.lt.s32.totalorder %s2809, 31
      %s2811 = scalar_select %p2810, %s2809, 31
      %s2812 = smul.addr %s2811, 8
      %s2813 = scalar_lea.vmem %s6, %s2812
      // Predicated region
      $region45: #{tpu_custom_call.1} parent=43 // pred_check
        %p2814 = pneg %p166
      $region46: #{tpu_custom_call.1} parent=43 // pred_check_branch
        %2816 = sbr.rel (%p2814) target = $region48
      $region47: #{tpu_custom_call.1} parent=43 // pred_region
        %s2817 = smul.u32 8, %s17
      $region48: #{tpu_custom_call.1} parent=43 // pred_fallthru
        _
    $region44: #{tpu_custom_call.1} parent=5 // pred_fallthru
      _
    %p2818 = scmp.le.s32.totalorder 2, %s12
    // Predicated region
    $region49: #{tpu_custom_call.1} parent=5 // pred_check
      %p2819 = pneg %p2818
    $region50: #{tpu_custom_call.1} parent=5 // pred_check_branch
      %2821 = sbr.rel (%p2819) target = $region52
    $region51: #{tpu_custom_call.1} parent=5 // pred_region
      %s2822 = ssub.s32 %s12, 2
      // Predicated region
      $region53: #{tpu_custom_call.1} parent=51 // pred_check
        %p2823 = pneg %p172
      $region54: #{tpu_custom_call.1} parent=51 // pred_check_branch
        %2825 = sbr.rel (%p2823) target = $region56
      $region55: #{tpu_custom_call.1} parent=51 // pred_region
        %s2826 = smul.u32 8, %s18
        %p2827 = scmp.lt.s32.totalorder %s2826, 31
        %s2828 = scalar_select %p2827, %s2826, 31
        %s2829 = smul.addr %s2828, 8
        %s2830 = scalar_lea.vmem %s6, %s2829
      $region56: #{tpu_custom_call.1} parent=51 // pred_fallthru
        _
    $region52: #{tpu_custom_call.1} parent=5 // pred_fallthru
      _
  $region6: #{tpu_custom_call.1} parent=0 // loop_footer
    %s16 = sadd.s32 1, %s12
  $region7: #{tpu_custom_call.1} parent=0 // loop_footer_branch
    %11 = sbr.rel target = $region3
  $region8: #{tpu_custom_call.1} parent=0 // loop_exit
    _

</llo_original>
